<compile_context>
chip_gen: v7x
topology: tpu7x:2x2x1
jax: 0.10.0
libtpu: 0.0.40
codegen_flags: <defaults>
</compile_context>

<pallas_src>
import functools

import jax
import jax.numpy as jnp
from jax.experimental import pallas as pl
from jax.experimental.pallas import tpu as pltpu


def _round_up(x, m):
    return (x + m - 1) // m * m


# ----------------------------------------------------------------------------
# Fused kernel: whole MLP (+ pe prologue/epilogue) for one row tile.
# Ref order: attr, [pe], per layer (w, packed_bias[gamma,beta]), out.
# ----------------------------------------------------------------------------
def _fused_encoder_kernel(*refs, n_layer, use_layernorm, pe_mode, eps,
                          matmul_dtype):
    refs = list(refs)
    o_ref = refs.pop()

    idx = 0
    x = refs[idx][...]
    idx += 1
    pe = None
    if pe_mode != "none":
        pe = refs[idx][...]
        idx += 1

    if pe_mode == "input":
        # Fuse [attr | pe] along lanes in VMEM -> single K=(attr_dim+pe_dim) dot.
        x = jnp.concatenate([x, pe.astype(x.dtype)], axis=-1)

    for i in range(n_layer):
        last = i == n_layer - 1
        w = refs[idx][...]          # (d_in, d_out), matmul_dtype (bf16)
        bgb_ref = refs[idx + 1]     # (1 or 3, d_out), float32
        idx += 2

        y = jnp.dot(x.astype(matmul_dtype), w,
                    preferred_element_type=jnp.float32)
        y = y + bgb_ref[0:1, :]

        if not last:
            if use_layernorm:
                gamma = bgb_ref[1:2, :]
                beta = bgb_ref[2:3, :]
                # Two-pass LN (mean, then centered variance): numerically safer
                # than E[x^2]-E[x]^2; tile is already VMEM-resident.
                mean = jnp.mean(y, axis=-1, keepdims=True)
                c = y - mean
                var = jnp.mean(c * c, axis=-1, keepdims=True)
                y = c * jax.lax.rsqrt(var + eps) * gamma + beta
            y = jnp.maximum(y, 0.0)   # ReLU; dropout is identity at inference
        x = y

    if pe_mode == "add":
        o_ref[...] = (x + pe.astype(jnp.float32)).astype(o_ref.dtype)
    elif pe_mode == "cat":
        d = x.shape[-1]
        # Two slice stores instead of a lane concat (avoids XLU shuffle + copy).
        o_ref[:, :d] = x.astype(o_ref.dtype)
        o_ref[:, d:] = pe.astype(o_ref.dtype)
    else:
        o_ref[...] = x.astype(o_ref.dtype)


# ----------------------------------------------------------------------------
# InputEncoder wrapper (parameter setup + single fused pallas_call)
# ----------------------------------------------------------------------------
class InputEncoderPallas:
    def __init__(self, hidden_dim, attr_dim, pe_dim, n_layer,
                 mlp_dropout_p, mlp_use_layernorm, mode, key,
                 matmul_dtype=jnp.bfloat16):
        self.mode = mode
        self.hidden_dim = hidden_dim
        self.attr_dim = attr_dim
        self.pe_dim = pe_dim
        self.use_layernorm = mlp_use_layernorm
        self.n_layer = n_layer
        self.matmul_dtype = matmul_dtype
        self.eps = 1e-5
        # TODO(synk): dropout is identity at inference; mlp_dropout_p unused.
        del mlp_dropout_p

        if mode == "input":
            mlp_in_dim = attr_dim + pe_dim
            mlp_out_dim = hidden_dim
        elif mode == "cat":
            mlp_in_dim = attr_dim
            mlp_out_dim = hidden_dim - pe_dim
            assert mlp_out_dim >= 32
        elif mode == "add":
            mlp_in_dim = attr_dim
            mlp_out_dim = hidden_dim
            assert pe_dim in (0, hidden_dim)
        else:
            raise ValueError(mode)
        self.mlp_out_dim = mlp_out_dim

        dims = [mlp_in_dim] + [mlp_out_dim] * n_layer
        self.params = []          # f32 master params (for the reference)
        self.kernel_weights = []  # bf16 weights streamed by the kernel
        self.kernel_bgb = []      # packed bias[,gamma,beta] per layer, f32
        for i in range(n_layer):
            d_in, d_out = dims[i], dims[i + 1]
            key, kw, kb = jax.random.split(key, 3)
            bound = 1.0 / float(d_in) ** 0.5
            w = jax.random.uniform(kw, (d_in, d_out), jnp.float32, -bound, bound)
            b = jax.random.uniform(kb, (d_out,), jnp.float32, -bound, bound)
            gamma = jnp.ones((d_out,), jnp.float32)
            beta = jnp.zeros((d_out,), jnp.float32)
            self.params.append((w, b, gamma, beta))
            self.kernel_weights.append(w.astype(matmul_dtype))
            last = i == n_layer - 1
            if (not last) and mlp_use_layernorm:
                self.kernel_bgb.append(jnp.stack([b, gamma, beta], axis=0))
            else:
                self.kernel_bgb.append(b.reshape(1, -1))

    def __call__(self, attr, pe):
        if self.mode == "input":
            # Guard: first-layer weight is (attr_dim+pe_dim, d); pe is required.
            assert pe is not None, "mode='input' requires pe"

        lead = attr.shape[:-1]
        attr2d = attr.reshape(-1, attr.shape[-1])          # keep caller dtype
        pe2d = None if pe is None else pe.reshape(-1, pe.shape[-1])
        n_rows = attr2d.shape[0]
        pe_mode = "none" if pe2d is None else self.mode
        out_dtype = attr.dtype
        if pe_mode == "cat":
            out_dim = self.mlp_out_dim + pe2d.shape[-1]    # == hidden_dim
        else:
            out_dim = self.mlp_out_dim

        # --- generation-aware tiling / VMEM budget ---------------------------
        try:
            vmem_cap = int(pltpu.get_tpu_info().vmem_capacity_bytes)
        except Exception:
            vmem_cap = 64 * 1024 * 1024                    # conservative (v7x)
        vmem_limit = min(vmem_cap * 3 // 4, 96 * 1024 * 1024)
        max_tile = 1024 if vmem_cap >= 100 * 1024 * 1024 else 512
        # >=2 grid programs so both v7x TensorCores get work; ragged tail block
        # instead of wrapper-side padding (rows are independent through LN).
        tile_n = max(8, min(max_tile, _round_up(pl.cdiv(n_rows, 2), 8)))
        grid = (pl.cdiv(n_rows, tile_n),)

        kern = functools.partial(
            _fused_encoder_kernel,
            n_layer=self.n_layer,
            use_layernorm=self.use_layernorm,
            pe_mode=pe_mode,
            eps=self.eps,
            matmul_dtype=self.matmul_dtype,
        )

        flops = 2 * n_rows * sum(int(w.shape[0]) * int(w.shape[1])
                                 for w in self.kernel_weights)
        transcendentals = n_rows * (self.n_layer - 1) if self.use_layernorm else 0
        bytes_acc = int(attr2d.size) * attr2d.dtype.itemsize
        if pe2d is not None:
            bytes_acc += int(pe2d.size) * pe2d.dtype.itemsize
        bytes_acc += sum(int(w.size) * w.dtype.itemsize for w in self.kernel_weights)
        bytes_acc += sum(int(p.size) * p.dtype.itemsize for p in self.kernel_bgb)
        bytes_acc += n_rows * out_dim * jnp.dtype(out_dtype).itemsize
        cost = pl.CostEstimate(flops=int(flops),
                               transcendentals=int(transcendentals),
                               bytes_accessed=int(bytes_acc))

        def run(single_buffer_consts):
            def const_spec(arr):
                if single_buffer_consts:
                    return pl.BlockSpec(arr.shape, lambda i: (0, 0),
                                        pipeline_mode=pl.Buffered(1))
                return pl.BlockSpec(arr.shape, lambda i: (0, 0))

            inputs = [attr2d]
            in_specs = [pl.BlockSpec((tile_n, attr2d.shape[-1]),
                                     lambda i: (i, 0))]
            if pe_mode != "none":
                inputs.append(pe2d)
                in_specs.append(pl.BlockSpec((tile_n, pe2d.shape[-1]),
                                             lambda i: (i, 0)))
            for w, bgb in zip(self.kernel_weights, self.kernel_bgb):
                inputs.append(w)
                in_specs.append(const_spec(w))
                inputs.append(bgb)
                in_specs.append(const_spec(bgb))

            call = pl.pallas_call(
                kern,
                out_shape=jax.ShapeDtypeStruct((n_rows, out_dim), out_dtype),
                grid=grid,
                in_specs=in_specs,
                out_specs=pl.BlockSpec((tile_n, out_dim), lambda i: (i, 0)),
                compiler_params=pltpu.CompilerParams(
                    dimension_semantics=("parallel",),
                    vmem_limit_bytes=int(vmem_limit),
                ),
                cost_estimate=cost,
            )
            return call(*inputs)

        try:
            # Single-buffered constants: weights/biases are VMEM-resident once
            # (matters on v7x's 64 MiB). Block here so any lowering/runtime
            # issue with Buffered(1) cleanly falls back to default buffering.
            out = jax.block_until_ready(run(single_buffer_consts=True))
        except Exception:
            out = run(single_buffer_consts=False)

        return out.reshape(*lead, out_dim)


# ----------------------------------------------------------------------------
# Pure-JAX reference: torch-module semantics with the same bf16-matmul /
# f32-everything-else numerics as the kernel.
# ----------------------------------------------------------------------------
def _reference(enc, attr, pe):
    mdt = enc.matmul_dtype

    def mlp(x):
        for i, (w, b, gamma, beta) in enumerate(enc.params):
            x = jnp.dot(x.astype(mdt), w.astype(mdt),
                        preferred_element_type=jnp.float32) + b
            if i < enc.n_layer - 1:
                if enc.use_layernorm:
                    m = jnp.mean(x, -1, keepdims=True)
                    c = x - m
                    v = jnp.mean(c * c, -1, keepdims=True)
                    x = c / jnp.sqrt(v + enc.eps) * gamma + beta
                x = jnp.maximum(x, 0.0)
        return x

    if pe is None:
        return mlp(attr)
    if enc.mode == "input":
        return mlp(jnp.concatenate([attr, pe], -1))
    if enc.mode == "cat":
        return jnp.concatenate([mlp(attr), pe], -1)
    return mlp(attr) + pe


if __name__ == "__main__":
    n_layer = 2
    key = jax.random.PRNGKey(0)

    # ---- mode='input': fused [attr|pe] first-layer matmul ----
    batch, seq = 2, 8
    hidden_dim, attr_dim, pe_dim = 64, 24, 40
    key, k_enc, k_a, k_p = jax.random.split(key, 4)
    enc = InputEncoderPallas(hidden_dim, attr_dim, pe_dim, n_layer,
                             mlp_dropout_p=0.1, mlp_use_layernorm=True,
                             mode="input", key=k_enc)
    attr = jax.random.normal(k_a, (batch, seq, attr_dim), jnp.float32)
    pe = jax.random.normal(k_p, (batch, seq, pe_dim), jnp.float32)
    out = jax.block_until_ready(enc(attr, pe))
    assert out.shape == (batch, seq, hidden_dim)
    assert out.dtype == jnp.float32
    ref = _reference(enc, attr, pe)
    assert jnp.allclose(out, ref, atol=5e-3, rtol=5e-3), \
        float(jnp.max(jnp.abs(out - ref)))

    # ---- mode='cat': ragged row grid (15 rows) + slice-store epilogue ----
    hidden_dim, attr_dim, pe_dim = 64, 16, 24
    key, k_enc, k_a, k_p = jax.random.split(key, 4)
    enc_cat = InputEncoderPallas(hidden_dim, attr_dim, pe_dim, n_layer,
                                 mlp_dropout_p=0.1, mlp_use_layernorm=True,
                                 mode="cat", key=k_enc)
    attr_c = jax.random.normal(k_a, (3, 5, attr_dim), jnp.float32)
    pe_c = jax.random.normal(k_p, (3, 5, pe_dim), jnp.float32)
    out_c = jax.block_until_ready(enc_cat(attr_c, pe_c))
    assert out_c.shape == (3, 5, hidden_dim)
    ref_c = _reference(enc_cat, attr_c, pe_c)
    assert jnp.allclose(out_c, ref_c, atol=5e-3, rtol=5e-3), \
        float(jnp.max(jnp.abs(out_c - ref_c)))

    # ---- mode='add': fused add epilogue ----
    hidden_dim, attr_dim, pe_dim = 64, 24, 64
    key, k_enc, k_a, k_p = jax.random.split(key, 4)
    enc_add = InputEncoderPallas(hidden_dim, attr_dim, pe_dim, n_layer,
                                 mlp_dropout_p=0.1, mlp_use_layernorm=True,
                                 mode="add", key=k_enc)
    attr_a = jax.random.normal(k_a, (batch, seq, attr_dim), jnp.float32)
    pe_a = jax.random.normal(k_p, (batch, seq, pe_dim), jnp.float32)
    out_a = jax.block_until_ready(enc_add(attr_a, pe_a))
    assert out_a.shape == (batch, seq, hidden_dim)
    ref_a = _reference(enc_add, attr_a, pe_a)
    assert jnp.allclose(out_a, ref_a, atol=5e-3, rtol=5e-3), \
        float(jnp.max(jnp.abs(out_a - ref_a)))

    print("KERNEL_OK")
</pallas_src>

<mosaic_0001>
module attributes {stable_mosaic.version = 11 : i64} {
  func.func @_fused_encoder_kernel(%arg0: i32, %arg1: memref<8x24xf32, #tpu.memory_space<vmem>>, %arg2: memref<8x40xf32, #tpu.memory_space<vmem>>, %arg3: memref<64x64xbf16, #tpu.memory_space<vmem>>, %arg4: memref<3x64xf32, #tpu.memory_space<vmem>>, %arg5: memref<64x64xbf16, #tpu.memory_space<vmem>>, %arg6: memref<1x64xf32, #tpu.memory_space<vmem>>, %arg7: memref<8x64xf32, #tpu.memory_space<vmem>>) attributes {dimension_semantics = [#tpu.dimension_semantics<parallel>], iteration_bounds = array<i64: 2>, scalar_prefetch = 0 : i64, scratch_operands = 0 : i64, tpu.core_type = #tpu.core_type<tc>, window_params = [{transform_indices = @transform_0, window_bounds = array<i64: 8, 24>}, {transform_indices = @transform_1, window_bounds = array<i64: 8, 40>}, {pipeline_mode = #tpu.pipeline_mode<synchronous>, transform_indices = @transform_2, window_bounds = array<i64: 64, 64>}, {pipeline_mode = #tpu.pipeline_mode<synchronous>, transform_indices = @transform_3, window_bounds = array<i64: 3, 64>}, {pipeline_mode = #tpu.pipeline_mode<synchronous>, transform_indices = @transform_4, window_bounds = array<i64: 64, 64>}, {pipeline_mode = #tpu.pipeline_mode<synchronous>, transform_indices = @transform_5, window_bounds = array<i64: 1, 64>}, {transform_indices = @transform_6, window_bounds = array<i64: 8, 64>}]} {
    %c0 = arith.constant 0 : index
    %c0_0 = arith.constant 0 : index
    %0 = vector.load %arg1[%c0, %c0_0] : memref<8x24xf32, #tpu.memory_space<vmem>>, vector<8x24xf32>
    %c0_1 = arith.constant 0 : index
    %c0_2 = arith.constant 0 : index
    %1 = vector.load %arg2[%c0_1, %c0_2] : memref<8x40xf32, #tpu.memory_space<vmem>>, vector<8x40xf32>
    %2 = tpu.concatenate %0, %1 in 1 : vector<8x24xf32>, vector<8x40xf32> -> vector<8x64xf32>
    %c0_3 = arith.constant 0 : index
    %c0_4 = arith.constant 0 : index
    %3 = vector.load %arg3[%c0_3, %c0_4] : memref<64x64xbf16, #tpu.memory_space<vmem>>, vector<64x64xbf16>
    %4 = arith.truncf %2 : vector<8x64xf32> to vector<8x64xbf16>
    %cst = arith.constant dense<0.000000e+00> : vector<8x64xf32>
    %5 = tpu.matmul %4, %3, %cst {dimension_numbers = #tpu.dot_dimension_numbers<[1], [0], [0], [1], [0, 0, 1, 1], [], []>} : vector<8x64xbf16>, vector<64x64xbf16>, vector<8x64xf32> -> vector<8x64xf32>
    %c0_5 = arith.constant 0 : index
    %c0_6 = arith.constant 0 : index
    %6 = vector.load %arg4[%c0_5, %c0_6] : memref<3x64xf32, #tpu.memory_space<vmem>>, vector<1x64xf32>
    %7 = vector.broadcast %6 : vector<1x64xf32> to vector<8x64xf32>
    %8 = arith.addf %5, %7 : vector<8x64xf32>
    %c1 = arith.constant 1 : index
    %c0_7 = arith.constant 0 : index
    %9 = vector.load %arg4[%c1, %c0_7] : memref<3x64xf32, #tpu.memory_space<vmem>>, vector<1x64xf32>
    %c2 = arith.constant 2 : index
    %c0_8 = arith.constant 0 : index
    %10 = vector.load %arg4[%c2, %c0_8] : memref<3x64xf32, #tpu.memory_space<vmem>>, vector<1x64xf32>
    %cst_9 = arith.constant dense<0.000000e+00> : vector<8xf32>
    %11 = vector.multi_reduction <add>, %8, %cst_9 [1] : vector<8x64xf32> to vector<8xf32>
    %12 = vector.shape_cast %11 : vector<8xf32> to vector<8x1xf32>
    %cst_10 = arith.constant 6.400000e+01 : f32
    %13 = vector.broadcast %cst_10 : f32 to vector<8x1xf32>
    %14 = arith.divf %12, %13 : vector<8x1xf32>
    %15 = vector.broadcast %14 : vector<8x1xf32> to vector<8x64xf32>
    %16 = arith.subf %8, %15 : vector<8x64xf32>
    %17 = arith.mulf %16, %16 : vector<8x64xf32>
    %cst_11 = arith.constant dense<0.000000e+00> : vector<8xf32>
    %18 = vector.multi_reduction <add>, %17, %cst_11 [1] : vector<8x64xf32> to vector<8xf32>
    %19 = vector.shape_cast %18 : vector<8xf32> to vector<8x1xf32>
    %cst_12 = arith.constant 6.400000e+01 : f32
    %20 = vector.broadcast %cst_12 : f32 to vector<8x1xf32>
    %21 = arith.divf %19, %20 : vector<8x1xf32>
    %cst_13 = arith.constant 9.99999974E-6 : f32
    %22 = vector.broadcast %cst_13 : f32 to vector<8x1xf32>
    %23 = arith.addf %21, %22 : vector<8x1xf32>
    %24 = math.rsqrt %23 : vector<8x1xf32>
    %25 = vector.broadcast %24 : vector<8x1xf32> to vector<8x64xf32>
    %26 = arith.mulf %16, %25 : vector<8x64xf32>
    %27 = vector.broadcast %9 : vector<1x64xf32> to vector<8x64xf32>
    %28 = arith.mulf %26, %27 : vector<8x64xf32>
    %29 = vector.broadcast %10 : vector<1x64xf32> to vector<8x64xf32>
    %30 = arith.addf %28, %29 : vector<8x64xf32>
    %cst_14 = arith.constant 0.000000e+00 : f32
    %31 = vector.broadcast %cst_14 : f32 to vector<8x64xf32>
    %32 = arith.maximumf %30, %31 : vector<8x64xf32>
    %c0_15 = arith.constant 0 : index
    %c0_16 = arith.constant 0 : index
    %33 = vector.load %arg5[%c0_15, %c0_16] : memref<64x64xbf16, #tpu.memory_space<vmem>>, vector<64x64xbf16>
    %34 = arith.truncf %32 : vector<8x64xf32> to vector<8x64xbf16>
    %cst_17 = arith.constant dense<0.000000e+00> : vector<8x64xf32>
    %35 = tpu.matmul %34, %33, %cst_17 {dimension_numbers = #tpu.dot_dimension_numbers<[1], [0], [0], [1], [0, 0, 1, 1], [], []>} : vector<8x64xbf16>, vector<64x64xbf16>, vector<8x64xf32> -> vector<8x64xf32>
    %c0_18 = arith.constant 0 : index
    %c0_19 = arith.constant 0 : index
    %36 = vector.load %arg6[%c0_18, %c0_19] : memref<1x64xf32, #tpu.memory_space<vmem>>, vector<1x64xf32>
    %37 = vector.broadcast %36 : vector<1x64xf32> to vector<8x64xf32>
    %38 = arith.addf %35, %37 : vector<8x64xf32>
    %c0_20 = arith.constant 0 : index
    %c0_21 = arith.constant 0 : index
    %39 = vector.load %arg7[%c0_20, %c0_21] : memref<8x64xf32, #tpu.memory_space<vmem>>, vector<8x64xf32>
    tpu.vector_store %arg7[%c0_20, %c0_21], %38 {strides = array<i32>} : memref<8x64xf32, #tpu.memory_space<vmem>>, vector<8x64xf32>,
    return
  }
  func.func @transform_0(%arg0: i32) -> (i32, i32) {
    %c0_i32 = arith.constant 0 : i32
    %c0_i32_0 = arith.constant 0 : i32
    return %arg0, %c0_i32 : i32, i32
  }
  func.func @transform_1(%arg0: i32) -> (i32, i32) {
    %c0_i32 = arith.constant 0 : i32
    %c0_i32_0 = arith.constant 0 : i32
    return %arg0, %c0_i32 : i32, i32
  }
  func.func @transform_2(%arg0: i32) -> (i32, i32) {
    %c0_i32 = arith.constant 0 : i32
    %c0_i32_0 = arith.constant 0 : i32
    %c0_i32_1 = arith.constant 0 : i32
    return %c0_i32, %c0_i32_0 : i32, i32
  }
  func.func @transform_3(%arg0: i32) -> (i32, i32) {
    %c0_i32 = arith.constant 0 : i32
    %c0_i32_0 = arith.constant 0 : i32
    %c0_i32_1 = arith.constant 0 : i32
    return %c0_i32, %c0_i32_0 : i32, i32
  }
  func.func @transform_4(%arg0: i32) -> (i32, i32) {
    %c0_i32 = arith.constant 0 : i32
    %c0_i32_0 = arith.constant 0 : i32
    %c0_i32_1 = arith.constant 0 : i32
    return %c0_i32, %c0_i32_0 : i32, i32
  }
  func.func @transform_5(%arg0: i32) -> (i32, i32) {
    %c0_i32 = arith.constant 0 : i32
    %c0_i32_0 = arith.constant 0 : i32
    %c0_i32_1 = arith.constant 0 : i32
    return %c0_i32, %c0_i32_0 : i32, i32
  }
  func.func @transform_6(%arg0: i32) -> (i32, i32) {
    %c0_i32 = arith.constant 0 : i32
    %c0_i32_0 = arith.constant 0 : i32
    return %arg0, %c0_i32 : i32, i32
  }
}

module attributes {stable_mosaic.version = 11 : i64} {
  func.func @_fused_encoder_kernel(%arg0: i32, %arg1: memref<8x24xf32, #tpu.memory_space<vmem>>, %arg2: memref<8x40xf32, #tpu.memory_space<vmem>>, %arg3: memref<64x64xbf16, #tpu.memory_space<vmem>>, %arg4: memref<3x64xf32, #tpu.memory_space<vmem>>, %arg5: memref<64x64xbf16, #tpu.memory_space<vmem>>, %arg6: memref<1x64xf32, #tpu.memory_space<vmem>>, %arg7: memref<8x64xf32, #tpu.memory_space<vmem>>) attributes {dimension_semantics = [#tpu.dimension_semantics<parallel>], iteration_bounds = array<i64: 2>, scalar_prefetch = 0 : i64, scratch_operands = 0 : i64, tpu.core_type = #tpu.core_type<tc>, window_params = [{transform_indices = @transform_0, window_bounds = array<i64: 8, 24>}, {transform_indices = @transform_1, window_bounds = array<i64: 8, 40>}, {pipeline_mode = #tpu.pipeline_mode<synchronous>, transform_indices = @transform_2, window_bounds = array<i64: 64, 64>}, {pipeline_mode = #tpu.pipeline_mode<synchronous>, transform_indices = @transform_3, window_bounds = array<i64: 3, 64>}, {pipeline_mode = #tpu.pipeline_mode<synchronous>, transform_indices = @transform_4, window_bounds = array<i64: 64, 64>}, {pipeline_mode = #tpu.pipeline_mode<synchronous>, transform_indices = @transform_5, window_bounds = array<i64: 1, 64>}, {transform_indices = @transform_6, window_bounds = array<i64: 8, 64>}]} {
    %c0 = arith.constant 0 : index
    %c0_0 = arith.constant 0 : index
    %0 = vector.load %arg1[%c0, %c0_0] : memref<8x24xf32, #tpu.memory_space<vmem>>, vector<8x24xf32>
    %c0_1 = arith.constant 0 : index
    %c0_2 = arith.constant 0 : index
    %1 = vector.load %arg2[%c0_1, %c0_2] : memref<8x40xf32, #tpu.memory_space<vmem>>, vector<8x40xf32>
    %2 = tpu.concatenate %0, %1 in 1 : vector<8x24xf32>, vector<8x40xf32> -> vector<8x64xf32>
    %c0_3 = arith.constant 0 : index
    %c0_4 = arith.constant 0 : index
    %3 = vector.load %arg3[%c0_3, %c0_4] : memref<64x64xbf16, #tpu.memory_space<vmem>>, vector<64x64xbf16>
    %4 = arith.truncf %2 : vector<8x64xf32> to vector<8x64xbf16>
    %cst = arith.constant dense<0.000000e+00> : vector<8x64xf32>
    %5 = tpu.matmul %4, %3, %cst {dimension_numbers = #tpu.dot_dimension_numbers<[1], [0], [0], [1], [0, 0, 1, 1], [], []>} : vector<8x64xbf16>, vector<64x64xbf16>, vector<8x64xf32> -> vector<8x64xf32>
    %c0_5 = arith.constant 0 : index
    %c0_6 = arith.constant 0 : index
    %6 = vector.load %arg4[%c0_5, %c0_6] : memref<3x64xf32, #tpu.memory_space<vmem>>, vector<1x64xf32>
    %7 = vector.broadcast %6 : vector<1x64xf32> to vector<8x64xf32>
    %8 = arith.addf %5, %7 : vector<8x64xf32>
    %c1 = arith.constant 1 : index
    %c0_7 = arith.constant 0 : index
    %9 = vector.load %arg4[%c1, %c0_7] : memref<3x64xf32, #tpu.memory_space<vmem>>, vector<1x64xf32>
    %c2 = arith.constant 2 : index
    %c0_8 = arith.constant 0 : index
    %10 = vector.load %arg4[%c2, %c0_8] : memref<3x64xf32, #tpu.memory_space<vmem>>, vector<1x64xf32>
    %cst_9 = arith.constant dense<0.000000e+00> : vector<8xf32>
    %11 = vector.multi_reduction <add>, %8, %cst_9 [1] : vector<8x64xf32> to vector<8xf32>
    %12 = vector.shape_cast %11 : vector<8xf32> to vector<8x1xf32>
    %cst_10 = arith.constant 6.400000e+01 : f32
    %13 = vector.broadcast %cst_10 : f32 to vector<8x1xf32>
    %14 = arith.divf %12, %13 : vector<8x1xf32>
    %15 = vector.broadcast %14 : vector<8x1xf32> to vector<8x64xf32>
    %16 = arith.subf %8, %15 : vector<8x64xf32>
    %17 = arith.mulf %16, %16 : vector<8x64xf32>
    %cst_11 = arith.constant dense<0.000000e+00> : vector<8xf32>
    %18 = vector.multi_reduction <add>, %17, %cst_11 [1] : vector<8x64xf32> to vector<8xf32>
    %19 = vector.shape_cast %18 : vector<8xf32> to vector<8x1xf32>
    %cst_12 = arith.constant 6.400000e+01 : f32
    %20 = vector.broadcast %cst_12 : f32 to vector<8x1xf32>
    %21 = arith.divf %19, %20 : vector<8x1xf32>
    %cst_13 = arith.constant 9.99999974E-6 : f32
    %22 = vector.broadcast %cst_13 : f32 to vector<8x1xf32>
    %23 = arith.addf %21, %22 : vector<8x1xf32>
    %24 = math.rsqrt %23 : vector<8x1xf32>
    %25 = vector.broadcast %24 : vector<8x1xf32> to vector<8x64xf32>
    %26 = arith.mulf %16, %25 : vector<8x64xf32>
    %27 = vector.broadcast %9 : vector<1x64xf32> to vector<8x64xf32>
    %28 = arith.mulf %26, %27 : vector<8x64xf32>
    %29 = vector.broadcast %10 : vector<1x64xf32> to vector<8x64xf32>
    %30 = arith.addf %28, %29 : vector<8x64xf32>
    %cst_14 = arith.constant 0.000000e+00 : f32
    %31 = vector.broadcast %cst_14 : f32 to vector<8x64xf32>
    %32 = arith.maximumf %30, %31 : vector<8x64xf32>
    %c0_15 = arith.constant 0 : index
    %c0_16 = arith.constant 0 : index
    %33 = vector.load %arg5[%c0_15, %c0_16] : memref<64x64xbf16, #tpu.memory_space<vmem>>, vector<64x64xbf16>
    %34 = arith.truncf %32 : vector<8x64xf32> to vector<8x64xbf16>
    %cst_17 = arith.constant dense<0.000000e+00> : vector<8x64xf32>
    %35 = tpu.matmul %34, %33, %cst_17 {dimension_numbers = #tpu.dot_dimension_numbers<[1], [0], [0], [1], [0, 0, 1, 1], [], []>} : vector<8x64xbf16>, vector<64x64xbf16>, vector<8x64xf32> -> vector<8x64xf32>
    %c0_18 = arith.constant 0 : index
    %c0_19 = arith.constant 0 : index
    %36 = vector.load %arg6[%c0_18, %c0_19] : memref<1x64xf32, #tpu.memory_space<vmem>>, vector<1x64xf32>
    %37 = vector.broadcast %36 : vector<1x64xf32> to vector<8x64xf32>
    %38 = arith.addf %35, %37 : vector<8x64xf32>
    %c0_20 = arith.constant 0 : index
    %c0_21 = arith.constant 0 : index
    %39 = vector.load %arg7[%c0_20, %c0_21] : memref<8x64xf32, #tpu.memory_space<vmem>>, vector<8x64xf32>
    tpu.vector_store %arg7[%c0_20, %c0_21], %38 {strides = array<i32>} : memref<8x64xf32, #tpu.memory_space<vmem>>, vector<8x64xf32>,
    return
  }
  func.func @transform_0(%arg0: i32) -> (i32, i32) {
    %c0_i32 = arith.constant 0 : i32
    %c0_i32_0 = arith.constant 0 : i32
    return %arg0, %c0_i32 : i32, i32
  }
  func.func @transform_1(%arg0: i32) -> (i32, i32) {
    %c0_i32 = arith.constant 0 : i32
    %c0_i32_0 = arith.constant 0 : i32
    return %arg0, %c0_i32 : i32, i32
  }
  func.func @transform_2(%arg0: i32) -> (i32, i32) {
    %c0_i32 = arith.constant 0 : i32
    %c0_i32_0 = arith.constant 0 : i32
    %c0_i32_1 = arith.constant 0 : i32
    return %c0_i32, %c0_i32_0 : i32, i32
  }
  func.func @transform_3(%arg0: i32) -> (i32, i32) {
    %c0_i32 = arith.constant 0 : i32
    %c0_i32_0 = arith.constant 0 : i32
    %c0_i32_1 = arith.constant 0 : i32
    return %c0_i32, %c0_i32_0 : i32, i32
  }
  func.func @transform_4(%arg0: i32) -> (i32, i32) {
    %c0_i32 = arith.constant 0 : i32
    %c0_i32_0 = arith.constant 0 : i32
    %c0_i32_1 = arith.constant 0 : i32
    return %c0_i32, %c0_i32_0 : i32, i32
  }
  func.func @transform_5(%arg0: i32) -> (i32, i32) {
    %c0_i32 = arith.constant 0 : i32
    %c0_i32_0 = arith.constant 0 : i32
    %c0_i32_1 = arith.constant 0 : i32
    return %c0_i32, %c0_i32_0 : i32, i32
  }
  func.func @transform_6(%arg0: i32) -> (i32, i32) {
    %c0_i32 = arith.constant 0 : i32
    %c0_i32_0 = arith.constant 0 : i32
    return %arg0, %c0_i32 : i32, i32
  }
}

</mosaic_0001>

<llo_original>
// kernel: tpu_custom_call.1
$region0: #{tpu_custom_call.1}
  #allocation0 [shape = 'u32[]', space=smem, size = 0x4, offset = 0x4, fixed_abs, tag = 'smem constant byte address 0x4 - core index']
  #allocation1 [shape = 'u32[144,128]{1,0:T(1,128)}', space=vmem, size = 0x12000, scoped, tag = 'internal scratch']
  %s0 = inlined_call_operand.hbm [shape: f32[16,24], index: 0, kind: input, shape index: {}]
  %s1 = inlined_call_operand.hbm [shape: f32[16,40], index: 1, kind: input, shape index: {}]
  %s2 = inlined_call_operand.hbm [shape: bf16[64,64], index: 2, kind: input, shape index: {}]
  %s3 = inlined_call_operand.vmem [shape: f32[3,64], index: 3, kind: input, shape index: {}]
  %s4 = inlined_call_operand.hbm [shape: bf16[64,64], index: 4, kind: input, shape index: {}]
  %s5 = inlined_call_operand.vmem [shape: f32[1,64], index: 5, kind: input, shape index: {}]
  %s6 = inlined_call_operand.hbm [shape: f32[16,64], index: 6, kind: output, shape index: {}]
  %s7 = sld [smem:[#allocation0]]
  $region73: #{tpu_custom_call.1} parent=0
    _
  %s9 = ssub.s32 1, %s7
  %s10 = scalar_select 0, %s9, %s7
  $region1: #{tpu_custom_call.1} parent=0
    #allocation2 [shape = 'u8[8192]{0}', space=vmem, size = 0x2000, scoped, tag = 'input window, operand 0']
    #allocation3 [shape = 's32[2]{0}', space=sflag, size = 0x8, scoped, tag = 'scoped memory for tpu_custom_call.1']
    #allocation4 [shape = 's32[2]{0}', space=sflag, size = 0x8, scoped, tag = 'scoped memory for tpu_custom_call.1']
    #allocation5 [shape = 'u8[8192]{0}', space=vmem, size = 0x2000, scoped, tag = 'input window, operand 1']
    #allocation6 [shape = 's32[2]{0}', space=sflag, size = 0x8, scoped, tag = 'scoped memory for tpu_custom_call.1']
    #allocation7 [shape = 'u8[16384]{0}', space=vmem, size = 0x4000, scoped, tag = 'input window, operand 2, single buffered']
    #allocation8 [shape = 'u8[16384]{0}', space=vmem, size = 0x4000, scoped, tag = 'input window, operand 4, single buffered']
    #allocation9 [shape = 's32[1]{0}', space=sflag, size = 0x4, scoped, tag = 'scoped memory for tpu_custom_call.1']
    #allocation10 [shape = 'u8[8192]{0}', space=vmem, size = 0x2000, scoped, tag = 'output window, operand 0']
    %11 = vsyncpa [#allocation3], 0
    %s12 = scalar_lea.sflag [#allocation3], 1
    %13 = vsyncpa %s12, 0
    %14 = vsyncpa [#allocation6], 0
    %s15 = scalar_lea.sflag [#allocation6], 1
    %16 = vsyncpa %s15, 0
    %17 = vsyncpa [#allocation9], 0
    %18 = vsyncpa [#allocation4], 0
    %s19 = scalar_lea.sflag [#allocation4], 1
    %20 = vsyncpa %s19, 0
    loop: start=0, step=1, limit=4
    $region2: #{tpu_custom_call.1} parent=1 // loop_pre_header
      _
    $region3: #{tpu_custom_call.1} parent=1 // loop_header
      %s22 = sphi 0, %s26
      %p23 = scmp.ge.s32.totalorder %s22, 4
      %s32 = sphi 0, %s34
      %s35 = sphi 0, %s32
      %s36 = sphi 0, %s35
      %s52 = sphi 0, %s36
      %s58 = sphi 0, %s60
      %s61 = sphi 0, %s58
      %s62 = sphi 0, %s61
      %s78 = sphi 0, %s62
      %s82 = sphi 0, %s82
      %s84 = sphi 0, %s82
      %s85 = sphi 0, %s84
      %s99 = sphi 0, %s85
      %s103 = sphi 0, %s103
      %s105 = sphi 0, %s103
      %s106 = sphi 0, %s105
      %s120 = sphi 0, %s106
      %s124 = sphi 0, %s124
      %s126 = sphi 0, %s124
      %s127 = sphi 0, %s126
      %s141 = sphi 0, %s127
      %s145 = sphi 0, %s145
      %s147 = sphi 0, %s145
      %s148 = sphi 0, %s147
      %s162 = sphi 0, %s148
      %s168 = sphi 0, %s170
      %s171 = sphi 0, %s168
      %s172 = sphi 0, %s171
      %s188 = sphi 0, %s172
    $region4: #{tpu_custom_call.1} parent=1 // loop_header_branch
      %25 = sbr.rel (%p23) target = $region8
    $region5: #{tpu_custom_call.1} parent=1 // loop_body
      %s27 = ssub.s32 %s22, 1
      %s28 = ssub.s32 %s22, 2
      %s29 = sadd.s32 %s22, 1
      %s30 = ssub.s32 %s22, %s29
      %p31 = scmp.eq.s32.totalorder %s30, 0
      %s33 = sadd.s32 %s32, 1
      %s34 = scalar_select %p31, %s32, %s33
      %p37 = pneg %p31
      %p38 = scmp.eq.s32.totalorder %s22, 1
      %p39 = por %p37, %p38
      %p40 = scmp.ne.s32.totalorder %s32, %s35
      %p41 = scmp.eq.s32.totalorder %s22, 0
      %p42 = por %p40, %p41
      %p43 = scmp.ne.s32.totalorder %s32, %s35
      %p44 = scmp.eq.s32.totalorder %s27, 1
      %p45 = por %p43, %p44
      %p46 = scmp.ne.s32.totalorder %s35, %s36
      %p47 = scmp.eq.s32.totalorder %s27, 0
      %p48 = por %p46, %p47
      %p49 = scmp.ne.s32.totalorder %s35, %s36
      %p50 = scmp.eq.s32.totalorder %s28, 1
      %p51 = por %p49, %p50
      %p53 = scmp.ne.s32.totalorder %s36, %s52
      %p54 = scmp.eq.s32.totalorder %s28, 0
      %p55 = por %p53, %p54
      %s56 = ssub.s32 %s22, %s29
      %p57 = scmp.eq.s32.totalorder %s56, 0
      %s59 = sadd.s32 %s58, 1
      %s60 = scalar_select %p57, %s58, %s59
      %p63 = pneg %p57
      %p64 = scmp.eq.s32.totalorder %s22, 1
      %p65 = por %p63, %p64
      %p66 = scmp.ne.s32.totalorder %s58, %s61
      %p67 = scmp.eq.s32.totalorder %s22, 0
      %p68 = por %p66, %p67
      %p69 = scmp.ne.s32.totalorder %s58, %s61
      %p70 = scmp.eq.s32.totalorder %s27, 1
      %p71 = por %p69, %p70
      %p72 = scmp.ne.s32.totalorder %s61, %s62
      %p73 = scmp.eq.s32.totalorder %s27, 0
      %p74 = por %p72, %p73
      %p75 = scmp.ne.s32.totalorder %s61, %s62
      %p76 = scmp.eq.s32.totalorder %s28, 1
      %p77 = por %p75, %p76
      %p79 = scmp.ne.s32.totalorder %s62, %s78
      %p80 = scmp.eq.s32.totalorder %s28, 0
      %p81 = por %p79, %p80
      %s83 = sadd.s32 %s82, 1
      %p86 = scmp.eq.s32.totalorder %s22, 1
      %p87 = scmp.ne.s32.totalorder %s82, %s84
      %p88 = scmp.eq.s32.totalorder %s22, 0
      %p89 = por %p87, %p88
      %p90 = scmp.ne.s32.totalorder %s82, %s84
      %p91 = scmp.eq.s32.totalorder %s27, 1
      %p92 = por %p90, %p91
      %p93 = scmp.ne.s32.totalorder %s84, %s85
      %p94 = scmp.eq.s32.totalorder %s27, 0
      %p95 = por %p93, %p94
      %p96 = scmp.ne.s32.totalorder %s84, %s85
      %p97 = scmp.eq.s32.totalorder %s28, 1
      %p98 = por %p96, %p97
      %p100 = scmp.ne.s32.totalorder %s85, %s99
      %p101 = scmp.eq.s32.totalorder %s28, 0
      %p102 = por %p100, %p101
      %s104 = sadd.s32 %s103, 1
      %p107 = scmp.eq.s32.totalorder %s22, 1
      %p108 = scmp.ne.s32.totalorder %s103, %s105
      %p109 = scmp.eq.s32.totalorder %s22, 0
      %p110 = por %p108, %p109
      %p111 = scmp.ne.s32.totalorder %s103, %s105
      %p112 = scmp.eq.s32.totalorder %s27, 1
      %p113 = por %p111, %p112
      %p114 = scmp.ne.s32.totalorder %s105, %s106
      %p115 = scmp.eq.s32.totalorder %s27, 0
      %p116 = por %p114, %p115
      %p117 = scmp.ne.s32.totalorder %s105, %s106
      %p118 = scmp.eq.s32.totalorder %s28, 1
      %p119 = por %p117, %p118
      %p121 = scmp.ne.s32.totalorder %s106, %s120
      %p122 = scmp.eq.s32.totalorder %s28, 0
      %p123 = por %p121, %p122
      %s125 = sadd.s32 %s124, 1
      %p128 = scmp.eq.s32.totalorder %s22, 1
      %p129 = scmp.ne.s32.totalorder %s124, %s126
      %p130 = scmp.eq.s32.totalorder %s22, 0
      %p131 = por %p129, %p130
      %p132 = scmp.ne.s32.totalorder %s124, %s126
      %p133 = scmp.eq.s32.totalorder %s27, 1
      %p134 = por %p132, %p133
      %p135 = scmp.ne.s32.totalorder %s126, %s127
      %p136 = scmp.eq.s32.totalorder %s27, 0
      %p137 = por %p135, %p136
      %p138 = scmp.ne.s32.totalorder %s126, %s127
      %p139 = scmp.eq.s32.totalorder %s28, 1
      %p140 = por %p138, %p139
      %p142 = scmp.ne.s32.totalorder %s127, %s141
      %p143 = scmp.eq.s32.totalorder %s28, 0
      %p144 = por %p142, %p143
      %s146 = sadd.s32 %s145, 1
      %p149 = scmp.eq.s32.totalorder %s22, 1
      %p150 = scmp.ne.s32.totalorder %s145, %s147
      %p151 = scmp.eq.s32.totalorder %s22, 0
      %p152 = por %p150, %p151
      %p153 = scmp.ne.s32.totalorder %s145, %s147
      %p154 = scmp.eq.s32.totalorder %s27, 1
      %p155 = por %p153, %p154
      %p156 = scmp.ne.s32.totalorder %s147, %s148
      %p157 = scmp.eq.s32.totalorder %s27, 0
      %p158 = por %p156, %p157
      %p159 = scmp.ne.s32.totalorder %s147, %s148
      %p160 = scmp.eq.s32.totalorder %s28, 1
      %p161 = por %p159, %p160
      %p163 = scmp.ne.s32.totalorder %s148, %s162
      %p164 = scmp.eq.s32.totalorder %s28, 0
      %p165 = por %p163, %p164
      %s166 = ssub.s32 %s22, %s29
      %p167 = scmp.eq.s32.totalorder %s166, 0
      %s169 = sadd.s32 %s168, 1
      %s170 = scalar_select %p167, %s168, %s169
      %p173 = pneg %p167
      %p174 = scmp.eq.s32.totalorder %s22, 1
      %p175 = por %p173, %p174
      %p176 = scmp.ne.s32.totalorder %s168, %s171
      %p177 = scmp.eq.s32.totalorder %s22, 0
      %p178 = por %p176, %p177
      %p179 = scmp.ne.s32.totalorder %s168, %s171
      %p180 = scmp.eq.s32.totalorder %s27, 1
      %p181 = por %p179, %p180
      %p182 = scmp.ne.s32.totalorder %s171, %s172
      %p183 = scmp.eq.s32.totalorder %s27, 0
      %p184 = por %p182, %p183
      %p185 = scmp.ne.s32.totalorder %s171, %s172
      %p186 = scmp.eq.s32.totalorder %s28, 1
      %p187 = por %p185, %p186
      %p189 = scmp.ne.s32.totalorder %s172, %s188
      %p190 = scmp.eq.s32.totalorder %s28, 0
      %p191 = por %p189, %p190
      %p192 = scmp.le.s32.totalorder 1, %s22
      %p193 = scmp.lt.s32.totalorder %s22, 3
      %p194 = pnand %p192, %p193
      %p195 = pneg %p194
      // Predicated region
      $region9: #{tpu_custom_call.1} parent=5 // pred_check
        _
      $region10: #{tpu_custom_call.1} parent=5 // pred_check_branch
        %197 = sbr.rel (%p194) target = $region12
      $region11: #{tpu_custom_call.1} parent=5 // pred_region
        %s198 = ssub.s32 %s22, 1
        // Predicated region
        $region13: #{tpu_custom_call.1} parent=11 // pred_check
          %p199 = pneg %p95
        $region14: #{tpu_custom_call.1} parent=11 // pred_check_branch
          %201 = sbr.rel (%p199) target = $region16
        $region15: #{tpu_custom_call.1} parent=11 // pred_region
          %s203 = ssub.s32 512, 512
          %204 = vsyncadd [#allocation6], %s203
          %s205 = sshll.u32 [#allocation7], 4
          %s206 = int_to_ptr.vmem [resolvable:$true] %s205
          %211 = dma.hbm_to_vmem [thread:$0]  %s2, 512, %s206, [#allocation6], 64, 64, 4
        $region16: #{tpu_custom_call.1} parent=11 // pred_fallthru
          _
        // Predicated region
        $region17: #{tpu_custom_call.1} parent=11 // pred_check
          %p212 = pneg %p116
        $region18: #{tpu_custom_call.1} parent=11 // pred_check_branch
          %214 = sbr.rel (%p212) target = $region20
        $region19: #{tpu_custom_call.1} parent=11 // pred_region
          _
        $region20: #{tpu_custom_call.1} parent=11 // pred_fallthru
          _
        // Predicated region
        $region21: #{tpu_custom_call.1} parent=11 // pred_check
          %p215 = pneg %p137
        $region22: #{tpu_custom_call.1} parent=11 // pred_check_branch
          %217 = sbr.rel (%p215) target = $region24
        $region23: #{tpu_custom_call.1} parent=11 // pred_region
          %s219 = ssub.s32 512, 512
          %220 = vsyncadd [#allocation9], %s219
          %s221 = sshll.u32 [#allocation8], 4
          %s222 = int_to_ptr.vmem [resolvable:$true] %s221
          %227 = dma.hbm_to_vmem [thread:$0]  %s4, 512, %s222, [#allocation9], 64, 64, 4
        $region24: #{tpu_custom_call.1} parent=11 // pred_fallthru
          _
        // Predicated region
        $region25: #{tpu_custom_call.1} parent=11 // pred_check
          %p228 = pneg %p158
        $region26: #{tpu_custom_call.1} parent=11 // pred_check_branch
          %230 = sbr.rel (%p228) target = $region28
        $region27: #{tpu_custom_call.1} parent=11 // pred_region
          _
        $region28: #{tpu_custom_call.1} parent=11 // pred_fallthru
          _
      $region12: #{tpu_custom_call.1} parent=5 // pred_fallthru
        _
      %p231 = scmp.lt.s32.totalorder %s22, 2
      // Predicated region
      $region29: #{tpu_custom_call.1} parent=5 // pred_check
        %p232 = pneg %p231
      $region30: #{tpu_custom_call.1} parent=5 // pred_check_branch
        %234 = sbr.rel (%p232) target = $region32
      $region31: #{tpu_custom_call.1} parent=5 // pred_region
        // Predicated region
        $region33: #{tpu_custom_call.1} parent=31 // pred_check
          %p235 = pneg %p42
        $region34: #{tpu_custom_call.1} parent=31 // pred_check_branch
          %237 = sbr.rel (%p235) target = $region36
        $region35: #{tpu_custom_call.1} parent=31 // pred_region
          %s238 = sand.u32 %s32, 1
          %s239 = scalar_lea.sflag [#allocation3], %s238
          %s240 = sand.u32 %s32, 1
          %s241 = smul.addr %s240, 8
          %s242 = scalar_lea.vmem [#allocation2], %s241
          %s244 = ssub.s32 128, 128
          %245 = vsyncadd %s239, %s244
          %s246 = smul.addr %s22, 128
          %s247 = scalar_lea.hbm %s0, %s246
          %s249 = sshll.u32 %s242, 4
          %s250 = int_to_ptr.vmem [resolvable:$true] %s249
          %252 = dma.hbm_to_vmem [thread:$0]  %s247, 128, %s250, %s239
        $region36: #{tpu_custom_call.1} parent=31 // pred_fallthru
          _
        // Predicated region
        $region37: #{tpu_custom_call.1} parent=31 // pred_check
          %p253 = pneg %p68
        $region38: #{tpu_custom_call.1} parent=31 // pred_check_branch
          %255 = sbr.rel (%p253) target = $region40
        $region39: #{tpu_custom_call.1} parent=31 // pred_region
          %s256 = sand.u32 %s22, 1
          %s257 = scalar_lea.sflag [#allocation6], %s256
          %s258 = sand.u32 %s58, 1
          %s259 = smul.addr %s258, 8
          %s260 = scalar_lea.vmem [#allocation5], %s259
          %s262 = ssub.s32 128, 128
          %263 = vsyncadd %s257, %s262
          %s264 = smul.addr %s22, 128
          %s265 = scalar_lea.hbm %s1, %s264
          %s267 = sshll.u32 %s260, 4
          %s268 = int_to_ptr.vmem [resolvable:$true] %s267
          %270 = dma.hbm_to_vmem [thread:$0]  %s265, 128, %s268, %s257
        $region40: #{tpu_custom_call.1} parent=31 // pred_fallthru
          _
      $region32: #{tpu_custom_call.1} parent=5 // pred_fallthru
        _
      %p271 = scmp.le.s32.totalorder 1, %s22
      %p272 = scmp.lt.s32.totalorder %s22, 3
      %p273 = pnand %p271, %p272
      %p274 = pneg %p273
      // Predicated region
      $region41: #{tpu_custom_call.1} parent=5 // pred_check
        _
      $region42: #{tpu_custom_call.1} parent=5 // pred_check_branch
        %276 = sbr.rel (%p273) target = $region44
      $region43: #{tpu_custom_call.1} parent=5 // pred_region
        %s277 = ssub.s32 %s22, 1
        %s278 = sand.u32 %s35, 1
        %s279 = scalar_lea.sflag [#allocation3], %s278
        %s280 = sand.u32 %s35, 1
        %s281 = smul.addr %s280, 8
        %s282 = scalar_lea.vmem [#allocation2], %s281
        // Predicated region
        $region45: #{tpu_custom_call.1} parent=43 // pred_check
          %p283 = pneg %p48
        $region46: #{tpu_custom_call.1} parent=43 // pred_check_branch
          %285 = sbr.rel (%p283) target = $region48
        $region47: #{tpu_custom_call.1} parent=43 // pred_region
          %286 = dma.done %s279, 128
        $region48: #{tpu_custom_call.1} parent=43 // pred_fallthru
          _
        %s287 = sand.u32 %s27, 1
        %s288 = scalar_lea.sflag [#allocation6], %s287
        %s289 = sand.u32 %s61, 1
        %s290 = smul.addr %s289, 8
        %s291 = scalar_lea.vmem [#allocation5], %s290
        // Predicated region
        $region49: #{tpu_custom_call.1} parent=43 // pred_check
          %p292 = pneg %p74
        $region50: #{tpu_custom_call.1} parent=43 // pred_check_branch
          %294 = sbr.rel (%p292) target = $region52
        $region51: #{tpu_custom_call.1} parent=43 // pred_region
          %295 = dma.done %s288, 128
        $region52: #{tpu_custom_call.1} parent=43 // pred_fallthru
          _
        // Predicated region
        $region53: #{tpu_custom_call.1} parent=43 // pred_check
          %p296 = pneg %p95
        $region54: #{tpu_custom_call.1} parent=43 // pred_check_branch
          %298 = sbr.rel (%p296) target = $region56
        $region55: #{tpu_custom_call.1} parent=43 // pred_region
          %299 = dma.done [#allocation6], 512
        $region56: #{tpu_custom_call.1} parent=43 // pred_fallthru
          _
        // Predicated region
        $region57: #{tpu_custom_call.1} parent=43 // pred_check
          %p300 = pneg %p137
        $region58: #{tpu_custom_call.1} parent=43 // pred_check_branch
          %302 = sbr.rel (%p300) target = $region60
        $region59: #{tpu_custom_call.1} parent=43 // pred_region
          %303 = dma.done [#allocation9], 512
        $region60: #{tpu_custom_call.1} parent=43 // pred_fallthru
          _
        %s304 = sand.u32 %s35, 1
        %s305 = scalar_lea.sflag [#allocation3], %s304
        %s306 = sand.u32 %s35, 1
        %s307 = smul.addr %s306, 8
        %s308 = scalar_lea.vmem [#allocation2], %s307
        %p309 = pneg %p48
        %p310 = pneg %p45
        %s311 = sand.u32 %s27, 1
        %s312 = scalar_lea.sflag [#allocation6], %s311
        %s313 = sand.u32 %s61, 1
        %s314 = smul.addr %s313, 8
        %s315 = scalar_lea.vmem [#allocation5], %s314
        %p316 = pneg %p74
        %p317 = pneg %p71
        %p318 = pneg %p95
        %p319 = pneg %p92
        %p320 = pneg %p116
        %p321 = pneg %p113
        %p322 = pneg %p137
        %p323 = pneg %p134
        %p324 = pneg %p158
        %p325 = pneg %p155
        %p326 = pneg %p184
        %p327 = pneg %p181
        %s328 = sand.u32 %s171, 1
        %s329 = scalar_lea.sflag [#allocation4], %s328
        %s330 = sand.u32 %s171, 1
        %s331 = smul.addr %s330, 8
        %s332 = scalar_lea.vmem [#allocation10], %s331
        %v334 = vld [vmem:[%s282] sm:$0xff]
        %v335 = vld [vmem:[%s291] sm:$0xff]
        %337 = vrot.lane.b32.xlu0 %v335, 24
        %v338 = vpop.permute.xlu0 %337
        %vm340 = vcmask 195584
        %v341 = vsel %vm340, %v334, %v338
        %v342 = vld [vmem:[#allocation7] sm:$0xf]
        %v343 = vld [vmem:[#allocation7 + $0x4] sm:$0xf]
        %v344 = vld [vmem:[#allocation7 + $0x8] sm:$0xf]
        %v345 = vld [vmem:[#allocation7 + $0xc] sm:$0xf]
        %v346 = vld [vmem:[#allocation7 + $0x10] sm:$0xf]
        %v347 = vld [vmem:[#allocation7 + $0x14] sm:$0xf]
        %v348 = vld [vmem:[#allocation7 + $0x18] sm:$0xf]
        %v349 = vld [vmem:[#allocation7 + $0x1c] sm:$0xf]
        %v350 = vpack.c.bf16 %v341, %v341
        %v351 = vld [vmem:[%s3] sm:$0x1]
        %v352 = vlaneseq
        %v353 = vshrl.u32 %v352, 7
        %v354 = vsub.s32 0, %v353
        %v355 = vrot.slane %v351, %v354
        %v364 = vunpack.c.l.b16 %v342
        %v365 = vunpack.c.l.b16 %v343
        %v366 = vunpack.c.l.b16 %v344
        %v367 = vunpack.c.l.b16 %v345
        %v368 = vunpack.c.l.b16 %v346
        %v369 = vunpack.c.l.b16 %v347
        %v370 = vunpack.c.l.b16 %v348
        %v371 = vunpack.c.l.b16 %v349
        %v372 = vpack.c.b16 %v365, %v364
        %v373 = vpack.c.b16 %v367, %v366
        %v374 = vpack.c.b16 %v369, %v368
        %v375 = vpack.c.b16 %v371, %v370
        %vm380 = vcmask 523264
        %v382 = vsel %vm380, %v350, 0
        %384 = vmatprep.subr.bf16.mxu0 0
        %385 = vmatpush1.bf16.msra.mxu0 %v372
        %386 = vmatprep.subr.bf16.mxu0 0
        %387 = vmatpush1.bf16.msra.mxu0 %v373
        %388 = vmatprep.subr.bf16.mxu0 0
        %389 = vmatpush1.bf16.msra.mxu0 %v374
        %390 = vmatprep.subr.bf16.mxu0 0
        %391 = vmatpush1.bf16.msra.mxu0 %v375
        %392 = vmatprep.subr.bf16.mxu0 0
        %393 = vmatpush1.bf16.msra.mxu0 0
        %394 = vmatprep.subr.bf16.mxu0 0
        %395 = vmatpush1.bf16.msra.mxu0 0
        %396 = vmatprep.subr.bf16.mxu0 0
        %397 = vmatpush1.bf16.msra.mxu0 0
        %398 = vmatprep.subr.bf16.mxu0 0
        %399 = vmatpush1.bf16.msra.mxu0 0
        %400 = vmatprep.subr.bf16.mxu0 0
        %401 = vmatpush1.bf16.msra.mxu0 0
        %402 = vmatprep.subr.bf16.mxu0 0
        %403 = vmatpush1.bf16.msra.mxu0 0
        %404 = vmatprep.subr.bf16.mxu0 0
        %405 = vmatpush1.bf16.msra.mxu0 0
        %406 = vmatprep.subr.bf16.mxu0 0
        %407 = vmatpush1.bf16.msra.mxu0 0
        %408 = vmatprep.subr.bf16.mxu0 0
        %409 = vmatpush1.bf16.msra.mxu0 0
        %410 = vmatprep.subr.bf16.mxu0 0
        %411 = vmatpush1.bf16.msra.mxu0 0
        %412 = vmatprep.subr.bf16.mxu0 0
        %413 = vmatpush1.bf16.msra.mxu0 0
        %414 = vmatprep.subr.bf16.mxu0 0
        %415 = vmatpush1.bf16.msra.mxu0 0
        %416 = vmatprep.mubr.bf16.mxu0 0
        %417 = vmatmul.mubr.bf16.gmra.mrb[0].mxu0 %v382
        %v418 = vpop.f32.mrb[0].mxu0
        %v419 = vadd.f32 %v355, %v418
        %v420 = vpop.f32.mrb[0].mxu0
        %v421 = vpop.f32.mrb[0].mxu0
        %v422 = vpop.f32.mrb[0].mxu0
        %423 = vdwg.mxu0
        %v424 = vld [vmem:[%s3 + $0x1] sm:$0x1]
        %v425 = vld [vmem:[%s3 + $0x2] sm:$0x1]
        %v426 = vsel %vm380, %v419, 0.0
        %427 = vadd.xlane.f32.xlu0 %v426
        %v428 = vpop.xlane.xlu0 %427
        %v429 = vrcp.pop 64.0
        %v430 = vmul.f32 %v428, %v429
        %v431 = vsub.f32 %v419, %v430
        %v432 = vmul.f32 %v431, %v431
        %v433 = vsel %vm380, %v432, 0.0
        %434 = vadd.xlane.f32.xlu0 %v433
        %v435 = vpop.xlane.xlu0 %434
        %v436 = vmul.f32 %v435, %v429
        %v437 = vadd.f32 %v436, 1e-05
        %v438 = vrsqrt.pop %v437
        %v439 = vmul.f32 %v431, %v438
        %v440 = vlaneseq
        %v441 = vshrl.u32 %v440, 7
        %v442 = vsub.s32 0, %v441
        %v443 = vrot.slane %v424, %v442
        %v444 = vmul.f32 %v439, %v443
        %v445 = vlaneseq
        %v446 = vshrl.u32 %v445, 7
        %v447 = vsub.s32 0, %v446
        %v448 = vrot.slane %v425, %v447
        %v449 = vadd.f32 %v444, %v448
        %v450 = vmax.f32 %v449, 0.0
        %v451 = vld [vmem:[#allocation8] sm:$0xf]
        %v452 = vld [vmem:[#allocation8 + $0x4] sm:$0xf]
        %v453 = vld [vmem:[#allocation8 + $0x8] sm:$0xf]
        %v454 = vld [vmem:[#allocation8 + $0xc] sm:$0xf]
        %v455 = vld [vmem:[#allocation8 + $0x10] sm:$0xf]
        %v456 = vld [vmem:[#allocation8 + $0x14] sm:$0xf]
        %v457 = vld [vmem:[#allocation8 + $0x18] sm:$0xf]
        %v458 = vld [vmem:[#allocation8 + $0x1c] sm:$0xf]
        %v459 = vpack.c.bf16 %v450, %v450
        %v460 = vld [vmem:[%s5] sm:$0x1]
        %v462 = vlaneseq
        %v463 = vshrl.u32 %v462, 7
        %v464 = vsub.s32 0, %v463
        %v465 = vrot.slane %v460, %v464
        %v475 = vunpack.c.l.b16 %v451
        %v476 = vunpack.c.l.b16 %v452
        %v477 = vunpack.c.l.b16 %v453
        %v478 = vunpack.c.l.b16 %v454
        %v479 = vunpack.c.l.b16 %v455
        %v480 = vunpack.c.l.b16 %v456
        %v481 = vunpack.c.l.b16 %v457
        %v482 = vunpack.c.l.b16 %v458
        %v483 = vpack.c.b16 %v476, %v475
        %v484 = vpack.c.b16 %v478, %v477
        %v485 = vpack.c.b16 %v480, %v479
        %v486 = vpack.c.b16 %v482, %v481
        %v492 = vsel %vm380, %v459, 0
        %494 = vmatprep.subr.bf16.mxu0 0
        %495 = vmatpush1.bf16.msra.mxu0 %v483
        %496 = vmatprep.subr.bf16.mxu0 0
        %497 = vmatpush1.bf16.msra.mxu0 %v484
        %498 = vmatprep.subr.bf16.mxu0 0
        %499 = vmatpush1.bf16.msra.mxu0 %v485
        %500 = vmatprep.subr.bf16.mxu0 0
        %501 = vmatpush1.bf16.msra.mxu0 %v486
        %502 = vmatprep.subr.bf16.mxu0 0
        %503 = vmatpush1.bf16.msra.mxu0 0
        %504 = vmatprep.subr.bf16.mxu0 0
        %505 = vmatpush1.bf16.msra.mxu0 0
        %506 = vmatprep.subr.bf16.mxu0 0
        %507 = vmatpush1.bf16.msra.mxu0 0
        %508 = vmatprep.subr.bf16.mxu0 0
        %509 = vmatpush1.bf16.msra.mxu0 0
        %510 = vmatprep.subr.bf16.mxu0 0
        %511 = vmatpush1.bf16.msra.mxu0 0
        %512 = vmatprep.subr.bf16.mxu0 0
        %513 = vmatpush1.bf16.msra.mxu0 0
        %514 = vmatprep.subr.bf16.mxu0 0
        %515 = vmatpush1.bf16.msra.mxu0 0
        %516 = vmatprep.subr.bf16.mxu0 0
        %517 = vmatpush1.bf16.msra.mxu0 0
        %518 = vmatprep.subr.bf16.mxu0 0
        %519 = vmatpush1.bf16.msra.mxu0 0
        %520 = vmatprep.subr.bf16.mxu0 0
        %521 = vmatpush1.bf16.msra.mxu0 0
        %522 = vmatprep.subr.bf16.mxu0 0
        %523 = vmatpush1.bf16.msra.mxu0 0
        %524 = vmatprep.subr.bf16.mxu0 0
        %525 = vmatpush1.bf16.msra.mxu0 0
        %526 = vmatprep.mubr.bf16.mxu0 0
        %527 = vmatmul.mubr.bf16.gmra.mrb[0].mxu0 %v492
        %v528 = vpop.f32.mrb[0].mxu0
        %v529 = vadd.f32 %v465, %v528
        %v530 = vpop.f32.mrb[0].mxu0
        %v531 = vpop.f32.mrb[0].mxu0
        %v532 = vpop.f32.mrb[0].mxu0
        %533 = vdwg.mxu0
        %534 = vst.msk [vmem:[%s332] sm:$0xff] %vm380, %v529
        %s535 = sand.u32 %s171, 1
        %s536 = scalar_lea.sflag [#allocation4], %s535
        %s537 = sand.u32 %s171, 1
        %s538 = smul.addr %s537, 8
        %s539 = scalar_lea.vmem [#allocation10], %s538
        // Predicated region
        $region61: #{tpu_custom_call.1} parent=43 // pred_check
          %p540 = pneg %p181
        $region62: #{tpu_custom_call.1} parent=43 // pred_check_branch
          %542 = sbr.rel (%p540) target = $region64
        $region63: #{tpu_custom_call.1} parent=43 // pred_region
          %s544 = ssub.s32 128, 128
          %545 = vsyncadd %s536, %s544
          %s546 = smul.addr %s27, 128
          %s547 = scalar_lea.hbm %s6, %s546
          %s549 = sshll.u32 %s539, 4
          %s550 = int_to_ptr.vmem [resolvable:$true] %s549
          %552 = dma.vmem_to_hbm [thread:$0]  %s550, 128, %s547, %s536
        $region64: #{tpu_custom_call.1} parent=43 // pred_fallthru
          _
      $region44: #{tpu_custom_call.1} parent=5 // pred_fallthru
        _
      %p553 = scmp.le.s32.totalorder 2, %s22
      // Predicated region
      $region65: #{tpu_custom_call.1} parent=5 // pred_check
        %p554 = pneg %p553
      $region66: #{tpu_custom_call.1} parent=5 // pred_check_branch
        %556 = sbr.rel (%p554) target = $region68
      $region67: #{tpu_custom_call.1} parent=5 // pred_region
        %s557 = ssub.s32 %s22, 2
        // Predicated region
        $region69: #{tpu_custom_call.1} parent=67 // pred_check
          %p558 = pneg %p187
        $region70: #{tpu_custom_call.1} parent=67 // pred_check_branch
          %560 = sbr.rel (%p558) target = $region72
        $region71: #{tpu_custom_call.1} parent=67 // pred_region
          %s561 = sand.u32 %s172, 1
          %s562 = scalar_lea.sflag [#allocation4], %s561
          %s563 = sand.u32 %s172, 1
          %s564 = smul.addr %s563, 8
          %s565 = scalar_lea.vmem [#allocation10], %s564
          %566 = dma.done %s562, 128
        $region72: #{tpu_custom_call.1} parent=67 // pred_fallthru
          _
      $region68: #{tpu_custom_call.1} parent=5 // pred_fallthru
        _
    $region6: #{tpu_custom_call.1} parent=1 // loop_footer
      %s26 = sadd.s32 1, %s22
    $region7: #{tpu_custom_call.1} parent=1 // loop_footer_branch
      %21 = sbr.rel target = $region3
    $region8: #{tpu_custom_call.1} parent=1 // loop_exit
      _
    %567 = vsyncpa [#allocation3], 1
    %s568 = scalar_lea.sflag [#allocation3], 1
    %569 = vsyncpa %s568, 1
    %570 = vsyncpa [#allocation6], 1
    %s571 = scalar_lea.sflag [#allocation6], 1
    %572 = vsyncpa %s571, 1
    %573 = vsyncpa [#allocation9], 1
    %574 = vsyncpa [#allocation4], 1
    %s575 = scalar_lea.sflag [#allocation4], 1
    %576 = vsyncpa %s575, 1

// kernel: tpu_custom_call.1
$region0: #{tpu_custom_call.1}
  #allocation0 [shape = 'u32[]', space=smem, size = 0x4, offset = 0x4, fixed_abs, tag = 'smem constant byte address 0x4 - core index']
  #allocation1 [shape = 'u32[144,128]{1,0:T(1,128)}', space=vmem, size = 0x12000, scoped, tag = 'internal scratch']
  %s0 = inlined_call_operand.hbm [shape: f32[16,24], index: 0, kind: input, shape index: {}]
  %s1 = inlined_call_operand.hbm [shape: f32[16,40], index: 1, kind: input, shape index: {}]
  %s2 = inlined_call_operand.hbm [shape: bf16[64,64], index: 2, kind: input, shape index: {}]
  %s3 = inlined_call_operand.vmem [shape: f32[3,64], index: 3, kind: input, shape index: {}]
  %s4 = inlined_call_operand.hbm [shape: bf16[64,64], index: 4, kind: input, shape index: {}]
  %s5 = inlined_call_operand.vmem [shape: f32[1,64], index: 5, kind: input, shape index: {}]
  %s6 = inlined_call_operand.hbm [shape: f32[16,64], index: 6, kind: output, shape index: {}]
  %s7 = sld [smem:[#allocation0]]
  $region73: #{tpu_custom_call.1} parent=0
    _
  %s9 = ssub.s32 1, %s7
  %s10 = scalar_select 0, %s9, %s7
  $region1: #{tpu_custom_call.1} parent=0
    #allocation2 [shape = 'u8[8192]{0}', space=vmem, size = 0x2000, scoped, tag = 'input window, operand 0']
    #allocation3 [shape = 's32[2]{0}', space=sflag, size = 0x8, scoped, tag = 'scoped memory for tpu_custom_call.1']
    #allocation4 [shape = 's32[2]{0}', space=sflag, size = 0x8, scoped, tag = 'scoped memory for tpu_custom_call.1']
    #allocation5 [shape = 'u8[8192]{0}', space=vmem, size = 0x2000, scoped, tag = 'input window, operand 1']
    #allocation6 [shape = 's32[2]{0}', space=sflag, size = 0x8, scoped, tag = 'scoped memory for tpu_custom_call.1']
    #allocation7 [shape = 'u8[16384]{0}', space=vmem, size = 0x4000, scoped, tag = 'input window, operand 2, single buffered']
    #allocation8 [shape = 'u8[16384]{0}', space=vmem, size = 0x4000, scoped, tag = 'input window, operand 4, single buffered']
    #allocation9 [shape = 's32[1]{0}', space=sflag, size = 0x4, scoped, tag = 'scoped memory for tpu_custom_call.1']
    #allocation10 [shape = 'u8[8192]{0}', space=vmem, size = 0x2000, scoped, tag = 'output window, operand 0']
    %11 = vsyncpa [#allocation3], 0
    %s12 = scalar_lea.sflag [#allocation3], 1
    %13 = vsyncpa %s12, 0
    %14 = vsyncpa [#allocation6], 0
    %s15 = scalar_lea.sflag [#allocation6], 1
    %16 = vsyncpa %s15, 0
    %17 = vsyncpa [#allocation9], 0
    %18 = vsyncpa [#allocation4], 0
    %s19 = scalar_lea.sflag [#allocation4], 1
    %20 = vsyncpa %s19, 0
    loop: start=0, step=1, limit=4
    $region2: #{tpu_custom_call.1} parent=1 // loop_pre_header
      _
    $region3: #{tpu_custom_call.1} parent=1 // loop_header
      %s22 = sphi 0, %s26
      %p23 = scmp.ge.s32.totalorder %s22, 4
      %s32 = sphi 0, %s34
      %s35 = sphi 0, %s32
      %s36 = sphi 0, %s35
      %s52 = sphi 0, %s36
      %s58 = sphi 0, %s60
      %s61 = sphi 0, %s58
      %s62 = sphi 0, %s61
      %s78 = sphi 0, %s62
      %s82 = sphi 0, %s82
      %s84 = sphi 0, %s82
      %s85 = sphi 0, %s84
      %s99 = sphi 0, %s85
      %s103 = sphi 0, %s103
      %s105 = sphi 0, %s103
      %s106 = sphi 0, %s105
      %s120 = sphi 0, %s106
      %s124 = sphi 0, %s124
      %s126 = sphi 0, %s124
      %s127 = sphi 0, %s126
      %s141 = sphi 0, %s127
      %s145 = sphi 0, %s145
      %s147 = sphi 0, %s145
      %s148 = sphi 0, %s147
      %s162 = sphi 0, %s148
      %s168 = sphi 0, %s170
      %s171 = sphi 0, %s168
      %s172 = sphi 0, %s171
      %s188 = sphi 0, %s172
    $region4: #{tpu_custom_call.1} parent=1 // loop_header_branch
      %25 = sbr.rel (%p23) target = $region8
    $region5: #{tpu_custom_call.1} parent=1 // loop_body
      %s27 = ssub.s32 %s22, 1
      %s28 = ssub.s32 %s22, 2
      %s29 = sadd.s32 %s22, 1
      %s30 = ssub.s32 %s22, %s29
      %p31 = scmp.eq.s32.totalorder %s30, 0
      %s33 = sadd.s32 %s32, 1
      %s34 = scalar_select %p31, %s32, %s33
      %p37 = pneg %p31
      %p38 = scmp.eq.s32.totalorder %s22, 1
      %p39 = por %p37, %p38
      %p40 = scmp.ne.s32.totalorder %s32, %s35
      %p41 = scmp.eq.s32.totalorder %s22, 0
      %p42 = por %p40, %p41
      %p43 = scmp.ne.s32.totalorder %s32, %s35
      %p44 = scmp.eq.s32.totalorder %s27, 1
      %p45 = por %p43, %p44
      %p46 = scmp.ne.s32.totalorder %s35, %s36
      %p47 = scmp.eq.s32.totalorder %s27, 0
      %p48 = por %p46, %p47
      %p49 = scmp.ne.s32.totalorder %s35, %s36
      %p50 = scmp.eq.s32.totalorder %s28, 1
      %p51 = por %p49, %p50
      %p53 = scmp.ne.s32.totalorder %s36, %s52
      %p54 = scmp.eq.s32.totalorder %s28, 0
      %p55 = por %p53, %p54
      %s56 = ssub.s32 %s22, %s29
      %p57 = scmp.eq.s32.totalorder %s56, 0
      %s59 = sadd.s32 %s58, 1
      %s60 = scalar_select %p57, %s58, %s59
      %p63 = pneg %p57
      %p64 = scmp.eq.s32.totalorder %s22, 1
      %p65 = por %p63, %p64
      %p66 = scmp.ne.s32.totalorder %s58, %s61
      %p67 = scmp.eq.s32.totalorder %s22, 0
      %p68 = por %p66, %p67
      %p69 = scmp.ne.s32.totalorder %s58, %s61
      %p70 = scmp.eq.s32.totalorder %s27, 1
      %p71 = por %p69, %p70
      %p72 = scmp.ne.s32.totalorder %s61, %s62
      %p73 = scmp.eq.s32.totalorder %s27, 0
      %p74 = por %p72, %p73
      %p75 = scmp.ne.s32.totalorder %s61, %s62
      %p76 = scmp.eq.s32.totalorder %s28, 1
      %p77 = por %p75, %p76
      %p79 = scmp.ne.s32.totalorder %s62, %s78
      %p80 = scmp.eq.s32.totalorder %s28, 0
      %p81 = por %p79, %p80
      %s83 = sadd.s32 %s82, 1
      %p86 = scmp.eq.s32.totalorder %s22, 1
      %p87 = scmp.ne.s32.totalorder %s82, %s84
      %p88 = scmp.eq.s32.totalorder %s22, 0
      %p89 = por %p87, %p88
      %p90 = scmp.ne.s32.totalorder %s82, %s84
      %p91 = scmp.eq.s32.totalorder %s27, 1
      %p92 = por %p90, %p91
      %p93 = scmp.ne.s32.totalorder %s84, %s85
      %p94 = scmp.eq.s32.totalorder %s27, 0
      %p95 = por %p93, %p94
      %p96 = scmp.ne.s32.totalorder %s84, %s85
      %p97 = scmp.eq.s32.totalorder %s28, 1
      %p98 = por %p96, %p97
      %p100 = scmp.ne.s32.totalorder %s85, %s99
      %p101 = scmp.eq.s32.totalorder %s28, 0
      %p102 = por %p100, %p101
      %s104 = sadd.s32 %s103, 1
      %p107 = scmp.eq.s32.totalorder %s22, 1
      %p108 = scmp.ne.s32.totalorder %s103, %s105
      %p109 = scmp.eq.s32.totalorder %s22, 0
      %p110 = por %p108, %p109
      %p111 = scmp.ne.s32.totalorder %s103, %s105
      %p112 = scmp.eq.s32.totalorder %s27, 1
      %p113 = por %p111, %p112
      %p114 = scmp.ne.s32.totalorder %s105, %s106
      %p115 = scmp.eq.s32.totalorder %s27, 0
      %p116 = por %p114, %p115
      %p117 = scmp.ne.s32.totalorder %s105, %s106
      %p118 = scmp.eq.s32.totalorder %s28, 1
      %p119 = por %p117, %p118
      %p121 = scmp.ne.s32.totalorder %s106, %s120
      %p122 = scmp.eq.s32.totalorder %s28, 0
      %p123 = por %p121, %p122
      %s125 = sadd.s32 %s124, 1
      %p128 = scmp.eq.s32.totalorder %s22, 1
      %p129 = scmp.ne.s32.totalorder %s124, %s126
      %p130 = scmp.eq.s32.totalorder %s22, 0
      %p131 = por %p129, %p130
      %p132 = scmp.ne.s32.totalorder %s124, %s126
      %p133 = scmp.eq.s32.totalorder %s27, 1
      %p134 = por %p132, %p133
      %p135 = scmp.ne.s32.totalorder %s126, %s127
      %p136 = scmp.eq.s32.totalorder %s27, 0
      %p137 = por %p135, %p136
      %p138 = scmp.ne.s32.totalorder %s126, %s127
      %p139 = scmp.eq.s32.totalorder %s28, 1
      %p140 = por %p138, %p139
      %p142 = scmp.ne.s32.totalorder %s127, %s141
      %p143 = scmp.eq.s32.totalorder %s28, 0
      %p144 = por %p142, %p143
      %s146 = sadd.s32 %s145, 1
      %p149 = scmp.eq.s32.totalorder %s22, 1
      %p150 = scmp.ne.s32.totalorder %s145, %s147
      %p151 = scmp.eq.s32.totalorder %s22, 0
      %p152 = por %p150, %p151
      %p153 = scmp.ne.s32.totalorder %s145, %s147
      %p154 = scmp.eq.s32.totalorder %s27, 1
      %p155 = por %p153, %p154
      %p156 = scmp.ne.s32.totalorder %s147, %s148
      %p157 = scmp.eq.s32.totalorder %s27, 0
      %p158 = por %p156, %p157
      %p159 = scmp.ne.s32.totalorder %s147, %s148
      %p160 = scmp.eq.s32.totalorder %s28, 1
      %p161 = por %p159, %p160
      %p163 = scmp.ne.s32.totalorder %s148, %s162
      %p164 = scmp.eq.s32.totalorder %s28, 0
      %p165 = por %p163, %p164
      %s166 = ssub.s32 %s22, %s29
      %p167 = scmp.eq.s32.totalorder %s166, 0
      %s169 = sadd.s32 %s168, 1
      %s170 = scalar_select %p167, %s168, %s169
      %p173 = pneg %p167
      %p174 = scmp.eq.s32.totalorder %s22, 1
      %p175 = por %p173, %p174
      %p176 = scmp.ne.s32.totalorder %s168, %s171
      %p177 = scmp.eq.s32.totalorder %s22, 0
      %p178 = por %p176, %p177
      %p179 = scmp.ne.s32.totalorder %s168, %s171
      %p180 = scmp.eq.s32.totalorder %s27, 1
      %p181 = por %p179, %p180
      %p182 = scmp.ne.s32.totalorder %s171, %s172
      %p183 = scmp.eq.s32.totalorder %s27, 0
      %p184 = por %p182, %p183
      %p185 = scmp.ne.s32.totalorder %s171, %s172
      %p186 = scmp.eq.s32.totalorder %s28, 1
      %p187 = por %p185, %p186
      %p189 = scmp.ne.s32.totalorder %s172, %s188
      %p190 = scmp.eq.s32.totalorder %s28, 0
      %p191 = por %p189, %p190
      %p192 = scmp.le.s32.totalorder 1, %s22
      %p193 = scmp.lt.s32.totalorder %s22, 3
      %p194 = pnand %p192, %p193
      %p195 = pneg %p194
      // Predicated region
      $region9: #{tpu_custom_call.1} parent=5 // pred_check
        _
      $region10: #{tpu_custom_call.1} parent=5 // pred_check_branch
        %197 = sbr.rel (%p194) target = $region12
      $region11: #{tpu_custom_call.1} parent=5 // pred_region
        %s198 = ssub.s32 %s22, 1
        // Predicated region
        $region13: #{tpu_custom_call.1} parent=11 // pred_check
          %p199 = pneg %p95
        $region14: #{tpu_custom_call.1} parent=11 // pred_check_branch
          %201 = sbr.rel (%p199) target = $region16
        $region15: #{tpu_custom_call.1} parent=11 // pred_region
          %s203 = ssub.s32 512, 512
          %204 = vsyncadd [#allocation6], %s203
          %s205 = sshll.u32 [#allocation7], 4
          %s206 = int_to_ptr.vmem [resolvable:$true] %s205
          %211 = dma.hbm_to_vmem [thread:$0]  %s2, 512, %s206, [#allocation6], 64, 64, 4
        $region16: #{tpu_custom_call.1} parent=11 // pred_fallthru
          _
        // Predicated region
        $region17: #{tpu_custom_call.1} parent=11 // pred_check
          %p212 = pneg %p116
        $region18: #{tpu_custom_call.1} parent=11 // pred_check_branch
          %214 = sbr.rel (%p212) target = $region20
        $region19: #{tpu_custom_call.1} parent=11 // pred_region
          _
        $region20: #{tpu_custom_call.1} parent=11 // pred_fallthru
          _
        // Predicated region
        $region21: #{tpu_custom_call.1} parent=11 // pred_check
          %p215 = pneg %p137
        $region22: #{tpu_custom_call.1} parent=11 // pred_check_branch
          %217 = sbr.rel (%p215) target = $region24
        $region23: #{tpu_custom_call.1} parent=11 // pred_region
          %s219 = ssub.s32 512, 512
          %220 = vsyncadd [#allocation9], %s219
          %s221 = sshll.u32 [#allocation8], 4
          %s222 = int_to_ptr.vmem [resolvable:$true] %s221
          %227 = dma.hbm_to_vmem [thread:$0]  %s4, 512, %s222, [#allocation9], 64, 64, 4
        $region24: #{tpu_custom_call.1} parent=11 // pred_fallthru
          _
        // Predicated region
        $region25: #{tpu_custom_call.1} parent=11 // pred_check
          %p228 = pneg %p158
        $region26: #{tpu_custom_call.1} parent=11 // pred_check_branch
          %230 = sbr.rel (%p228) target = $region28
        $region27: #{tpu_custom_call.1} parent=11 // pred_region
          _
        $region28: #{tpu_custom_call.1} parent=11 // pred_fallthru
          _
      $region12: #{tpu_custom_call.1} parent=5 // pred_fallthru
        _
      %p231 = scmp.lt.s32.totalorder %s22, 2
      // Predicated region
      $region29: #{tpu_custom_call.1} parent=5 // pred_check
        %p232 = pneg %p231
      $region30: #{tpu_custom_call.1} parent=5 // pred_check_branch
        %234 = sbr.rel (%p232) target = $region32
      $region31: #{tpu_custom_call.1} parent=5 // pred_region
        // Predicated region
        $region33: #{tpu_custom_call.1} parent=31 // pred_check
          %p235 = pneg %p42
        $region34: #{tpu_custom_call.1} parent=31 // pred_check_branch
          %237 = sbr.rel (%p235) target = $region36
        $region35: #{tpu_custom_call.1} parent=31 // pred_region
          %s238 = sand.u32 %s32, 1
          %s239 = scalar_lea.sflag [#allocation3], %s238
          %s240 = sand.u32 %s32, 1
          %s241 = smul.addr %s240, 8
          %s242 = scalar_lea.vmem [#allocation2], %s241
          %s244 = ssub.s32 128, 128
          %245 = vsyncadd %s239, %s244
          %s246 = smul.addr %s22, 128
          %s247 = scalar_lea.hbm %s0, %s246
          %s249 = sshll.u32 %s242, 4
          %s250 = int_to_ptr.vmem [resolvable:$true] %s249
          %252 = dma.hbm_to_vmem [thread:$0]  %s247, 128, %s250, %s239
        $region36: #{tpu_custom_call.1} parent=31 // pred_fallthru
          _
        // Predicated region
        $region37: #{tpu_custom_call.1} parent=31 // pred_check
          %p253 = pneg %p68
        $region38: #{tpu_custom_call.1} parent=31 // pred_check_branch
          %255 = sbr.rel (%p253) target = $region40
        $region39: #{tpu_custom_call.1} parent=31 // pred_region
          %s256 = sand.u32 %s22, 1
          %s257 = scalar_lea.sflag [#allocation6], %s256
          %s258 = sand.u32 %s58, 1
          %s259 = smul.addr %s258, 8
          %s260 = scalar_lea.vmem [#allocation5], %s259
          %s262 = ssub.s32 128, 128
          %263 = vsyncadd %s257, %s262
          %s264 = smul.addr %s22, 128
          %s265 = scalar_lea.hbm %s1, %s264
          %s267 = sshll.u32 %s260, 4
          %s268 = int_to_ptr.vmem [resolvable:$true] %s267
          %270 = dma.hbm_to_vmem [thread:$0]  %s265, 128, %s268, %s257
        $region40: #{tpu_custom_call.1} parent=31 // pred_fallthru
          _
      $region32: #{tpu_custom_call.1} parent=5 // pred_fallthru
        _
      %p271 = scmp.le.s32.totalorder 1, %s22
      %p272 = scmp.lt.s32.totalorder %s22, 3
      %p273 = pnand %p271, %p272
      %p274 = pneg %p273
      // Predicated region
      $region41: #{tpu_custom_call.1} parent=5 // pred_check
        _
      $region42: #{tpu_custom_call.1} parent=5 // pred_check_branch
        %276 = sbr.rel (%p273) target = $region44
      $region43: #{tpu_custom_call.1} parent=5 // pred_region
        %s277 = ssub.s32 %s22, 1
        %s278 = sand.u32 %s35, 1
        %s279 = scalar_lea.sflag [#allocation3], %s278
        %s280 = sand.u32 %s35, 1
        %s281 = smul.addr %s280, 8
        %s282 = scalar_lea.vmem [#allocation2], %s281
        // Predicated region
        $region45: #{tpu_custom_call.1} parent=43 // pred_check
          %p283 = pneg %p48
        $region46: #{tpu_custom_call.1} parent=43 // pred_check_branch
          %285 = sbr.rel (%p283) target = $region48
        $region47: #{tpu_custom_call.1} parent=43 // pred_region
          %286 = dma.done %s279, 128
        $region48: #{tpu_custom_call.1} parent=43 // pred_fallthru
          _
        %s287 = sand.u32 %s27, 1
        %s288 = scalar_lea.sflag [#allocation6], %s287
        %s289 = sand.u32 %s61, 1
        %s290 = smul.addr %s289, 8
        %s291 = scalar_lea.vmem [#allocation5], %s290
        // Predicated region
        $region49: #{tpu_custom_call.1} parent=43 // pred_check
          %p292 = pneg %p74
        $region50: #{tpu_custom_call.1} parent=43 // pred_check_branch
          %294 = sbr.rel (%p292) target = $region52
        $region51: #{tpu_custom_call.1} parent=43 // pred_region
          %295 = dma.done %s288, 128
        $region52: #{tpu_custom_call.1} parent=43 // pred_fallthru
          _
        // Predicated region
        $region53: #{tpu_custom_call.1} parent=43 // pred_check
          %p296 = pneg %p95
        $region54: #{tpu_custom_call.1} parent=43 // pred_check_branch
          %298 = sbr.rel (%p296) target = $region56
        $region55: #{tpu_custom_call.1} parent=43 // pred_region
          %299 = dma.done [#allocation6], 512
        $region56: #{tpu_custom_call.1} parent=43 // pred_fallthru
          _
        // Predicated region
        $region57: #{tpu_custom_call.1} parent=43 // pred_check
          %p300 = pneg %p137
        $region58: #{tpu_custom_call.1} parent=43 // pred_check_branch
          %302 = sbr.rel (%p300) target = $region60
        $region59: #{tpu_custom_call.1} parent=43 // pred_region
          %303 = dma.done [#allocation9], 512
        $region60: #{tpu_custom_call.1} parent=43 // pred_fallthru
          _
        %s304 = sand.u32 %s35, 1
        %s305 = scalar_lea.sflag [#allocation3], %s304
        %s306 = sand.u32 %s35, 1
        %s307 = smul.addr %s306, 8
        %s308 = scalar_lea.vmem [#allocation2], %s307
        %p309 = pneg %p48
        %p310 = pneg %p45
        %s311 = sand.u32 %s27, 1
        %s312 = scalar_lea.sflag [#allocation6], %s311
        %s313 = sand.u32 %s61, 1
        %s314 = smul.addr %s313, 8
        %s315 = scalar_lea.vmem [#allocation5], %s314
        %p316 = pneg %p74
        %p317 = pneg %p71
        %p318 = pneg %p95
        %p319 = pneg %p92
        %p320 = pneg %p116
        %p321 = pneg %p113
        %p322 = pneg %p137
        %p323 = pneg %p134
        %p324 = pneg %p158
        %p325 = pneg %p155
        %p326 = pneg %p184
        %p327 = pneg %p181
        %s328 = sand.u32 %s171, 1
        %s329 = scalar_lea.sflag [#allocation4], %s328
        %s330 = sand.u32 %s171, 1
        %s331 = smul.addr %s330, 8
        %s332 = scalar_lea.vmem [#allocation10], %s331
        %v334 = vld [vmem:[%s282] sm:$0xff]
        %v335 = vld [vmem:[%s291] sm:$0xff]
        %337 = vrot.lane.b32.xlu0 %v335, 24
        %v338 = vpop.permute.xlu0 %337
        %vm340 = vcmask 195584
        %v341 = vsel %vm340, %v334, %v338
        %v342 = vld [vmem:[#allocation7] sm:$0xf]
        %v343 = vld [vmem:[#allocation7 + $0x4] sm:$0xf]
        %v344 = vld [vmem:[#allocation7 + $0x8] sm:$0xf]
        %v345 = vld [vmem:[#allocation7 + $0xc] sm:$0xf]
        %v346 = vld [vmem:[#allocation7 + $0x10] sm:$0xf]
        %v347 = vld [vmem:[#allocation7 + $0x14] sm:$0xf]
        %v348 = vld [vmem:[#allocation7 + $0x18] sm:$0xf]
        %v349 = vld [vmem:[#allocation7 + $0x1c] sm:$0xf]
        %v350 = vpack.c.bf16 %v341, %v341
        %v351 = vld [vmem:[%s3] sm:$0x1]
        %v352 = vlaneseq
        %v353 = vshrl.u32 %v352, 7
        %v354 = vsub.s32 0, %v353
        %v355 = vrot.slane %v351, %v354
        %v364 = vunpack.c.l.b16 %v342
        %v365 = vunpack.c.l.b16 %v343
        %v366 = vunpack.c.l.b16 %v344
        %v367 = vunpack.c.l.b16 %v345
        %v368 = vunpack.c.l.b16 %v346
        %v369 = vunpack.c.l.b16 %v347
        %v370 = vunpack.c.l.b16 %v348
        %v371 = vunpack.c.l.b16 %v349
        %v372 = vpack.c.b16 %v365, %v364
        %v373 = vpack.c.b16 %v367, %v366
        %v374 = vpack.c.b16 %v369, %v368
        %v375 = vpack.c.b16 %v371, %v370
        %vm380 = vcmask 523264
        %v382 = vsel %vm380, %v350, 0
        %384 = vmatprep.subr.bf16.mxu0 0
        %385 = vmatpush1.bf16.msra.mxu0 %v372
        %386 = vmatprep.subr.bf16.mxu0 0
        %387 = vmatpush1.bf16.msra.mxu0 %v373
        %388 = vmatprep.subr.bf16.mxu0 0
        %389 = vmatpush1.bf16.msra.mxu0 %v374
        %390 = vmatprep.subr.bf16.mxu0 0
        %391 = vmatpush1.bf16.msra.mxu0 %v375
        %392 = vmatprep.subr.bf16.mxu0 0
        %393 = vmatpush1.bf16.msra.mxu0 0
        %394 = vmatprep.subr.bf16.mxu0 0
        %395 = vmatpush1.bf16.msra.mxu0 0
        %396 = vmatprep.subr.bf16.mxu0 0
        %397 = vmatpush1.bf16.msra.mxu0 0
        %398 = vmatprep.subr.bf16.mxu0 0
        %399 = vmatpush1.bf16.msra.mxu0 0
        %400 = vmatprep.subr.bf16.mxu0 0
        %401 = vmatpush1.bf16.msra.mxu0 0
        %402 = vmatprep.subr.bf16.mxu0 0
        %403 = vmatpush1.bf16.msra.mxu0 0
        %404 = vmatprep.subr.bf16.mxu0 0
        %405 = vmatpush1.bf16.msra.mxu0 0
        %406 = vmatprep.subr.bf16.mxu0 0
        %407 = vmatpush1.bf16.msra.mxu0 0
        %408 = vmatprep.subr.bf16.mxu0 0
        %409 = vmatpush1.bf16.msra.mxu0 0
        %410 = vmatprep.subr.bf16.mxu0 0
        %411 = vmatpush1.bf16.msra.mxu0 0
        %412 = vmatprep.subr.bf16.mxu0 0
        %413 = vmatpush1.bf16.msra.mxu0 0
        %414 = vmatprep.subr.bf16.mxu0 0
        %415 = vmatpush1.bf16.msra.mxu0 0
        %416 = vmatprep.mubr.bf16.mxu0 0
        %417 = vmatmul.mubr.bf16.gmra.mrb[0].mxu0 %v382
        %v418 = vpop.f32.mrb[0].mxu0
        %v419 = vadd.f32 %v355, %v418
        %v420 = vpop.f32.mrb[0].mxu0
        %v421 = vpop.f32.mrb[0].mxu0
        %v422 = vpop.f32.mrb[0].mxu0
        %423 = vdwg.mxu0
        %v424 = vld [vmem:[%s3 + $0x1] sm:$0x1]
        %v425 = vld [vmem:[%s3 + $0x2] sm:$0x1]
        %v426 = vsel %vm380, %v419, 0.0
        %427 = vadd.xlane.f32.xlu0 %v426
        %v428 = vpop.xlane.xlu0 %427
        %v429 = vrcp.pop 64.0
        %v430 = vmul.f32 %v428, %v429
        %v431 = vsub.f32 %v419, %v430
        %v432 = vmul.f32 %v431, %v431
        %v433 = vsel %vm380, %v432, 0.0
        %434 = vadd.xlane.f32.xlu0 %v433
        %v435 = vpop.xlane.xlu0 %434
        %v436 = vmul.f32 %v435, %v429
        %v437 = vadd.f32 %v436, 1e-05
        %v438 = vrsqrt.pop %v437
        %v439 = vmul.f32 %v431, %v438
        %v440 = vlaneseq
        %v441 = vshrl.u32 %v440, 7
        %v442 = vsub.s32 0, %v441
        %v443 = vrot.slane %v424, %v442
        %v444 = vmul.f32 %v439, %v443
        %v445 = vlaneseq
        %v446 = vshrl.u32 %v445, 7
        %v447 = vsub.s32 0, %v446
        %v448 = vrot.slane %v425, %v447
        %v449 = vadd.f32 %v444, %v448
        %v450 = vmax.f32 %v449, 0.0
        %v451 = vld [vmem:[#allocation8] sm:$0xf]
        %v452 = vld [vmem:[#allocation8 + $0x4] sm:$0xf]
        %v453 = vld [vmem:[#allocation8 + $0x8] sm:$0xf]
        %v454 = vld [vmem:[#allocation8 + $0xc] sm:$0xf]
        %v455 = vld [vmem:[#allocation8 + $0x10] sm:$0xf]
        %v456 = vld [vmem:[#allocation8 + $0x14] sm:$0xf]
        %v457 = vld [vmem:[#allocation8 + $0x18] sm:$0xf]
        %v458 = vld [vmem:[#allocation8 + $0x1c] sm:$0xf]
        %v459 = vpack.c.bf16 %v450, %v450
        %v460 = vld [vmem:[%s5] sm:$0x1]
        %v462 = vlaneseq
        %v463 = vshrl.u32 %v462, 7
        %v464 = vsub.s32 0, %v463
        %v465 = vrot.slane %v460, %v464
        %v475 = vunpack.c.l.b16 %v451
        %v476 = vunpack.c.l.b16 %v452
        %v477 = vunpack.c.l.b16 %v453
        %v478 = vunpack.c.l.b16 %v454
        %v479 = vunpack.c.l.b16 %v455
        %v480 = vunpack.c.l.b16 %v456
        %v481 = vunpack.c.l.b16 %v457
        %v482 = vunpack.c.l.b16 %v458
        %v483 = vpack.c.b16 %v476, %v475
        %v484 = vpack.c.b16 %v478, %v477
        %v485 = vpack.c.b16 %v480, %v479
        %v486 = vpack.c.b16 %v482, %v481
        %v492 = vsel %vm380, %v459, 0
        %494 = vmatprep.subr.bf16.mxu0 0
        %495 = vmatpush1.bf16.msra.mxu0 %v483
        %496 = vmatprep.subr.bf16.mxu0 0
        %497 = vmatpush1.bf16.msra.mxu0 %v484
        %498 = vmatprep.subr.bf16.mxu0 0
        %499 = vmatpush1.bf16.msra.mxu0 %v485
        %500 = vmatprep.subr.bf16.mxu0 0
        %501 = vmatpush1.bf16.msra.mxu0 %v486
        %502 = vmatprep.subr.bf16.mxu0 0
        %503 = vmatpush1.bf16.msra.mxu0 0
        %504 = vmatprep.subr.bf16.mxu0 0
        %505 = vmatpush1.bf16.msra.mxu0 0
        %506 = vmatprep.subr.bf16.mxu0 0
        %507 = vmatpush1.bf16.msra.mxu0 0
        %508 = vmatprep.subr.bf16.mxu0 0
        %509 = vmatpush1.bf16.msra.mxu0 0
        %510 = vmatprep.subr.bf16.mxu0 0
        %511 = vmatpush1.bf16.msra.mxu0 0
        %512 = vmatprep.subr.bf16.mxu0 0
        %513 = vmatpush1.bf16.msra.mxu0 0
        %514 = vmatprep.subr.bf16.mxu0 0
        %515 = vmatpush1.bf16.msra.mxu0 0
        %516 = vmatprep.subr.bf16.mxu0 0
        %517 = vmatpush1.bf16.msra.mxu0 0
        %518 = vmatprep.subr.bf16.mxu0 0
        %519 = vmatpush1.bf16.msra.mxu0 0
        %520 = vmatprep.subr.bf16.mxu0 0
        %521 = vmatpush1.bf16.msra.mxu0 0
        %522 = vmatprep.subr.bf16.mxu0 0
        %523 = vmatpush1.bf16.msra.mxu0 0
        %524 = vmatprep.subr.bf16.mxu0 0
        %525 = vmatpush1.bf16.msra.mxu0 0
        %526 = vmatprep.mubr.bf16.mxu0 0
        %527 = vmatmul.mubr.bf16.gmra.mrb[0].mxu0 %v492
        %v528 = vpop.f32.mrb[0].mxu0
        %v529 = vadd.f32 %v465, %v528
        %v530 = vpop.f32.mrb[0].mxu0
        %v531 = vpop.f32.mrb[0].mxu0
        %v532 = vpop.f32.mrb[0].mxu0
        %533 = vdwg.mxu0
        %534 = vst.msk [vmem:[%s332] sm:$0xff] %vm380, %v529
        %s535 = sand.u32 %s171, 1
        %s536 = scalar_lea.sflag [#allocation4], %s535
        %s537 = sand.u32 %s171, 1
        %s538 = smul.addr %s537, 8
        %s539 = scalar_lea.vmem [#allocation10], %s538
        // Predicated region
        $region61: #{tpu_custom_call.1} parent=43 // pred_check
          %p540 = pneg %p181
        $region62: #{tpu_custom_call.1} parent=43 // pred_check_branch
          %542 = sbr.rel (%p540) target = $region64
        $region63: #{tpu_custom_call.1} parent=43 // pred_region
          %s544 = ssub.s32 128, 128
          %545 = vsyncadd %s536, %s544
          %s546 = smul.addr %s27, 128
          %s547 = scalar_lea.hbm %s6, %s546
          %s549 = sshll.u32 %s539, 4
          %s550 = int_to_ptr.vmem [resolvable:$true] %s549
          %552 = dma.vmem_to_hbm [thread:$0]  %s550, 128, %s547, %s536
        $region64: #{tpu_custom_call.1} parent=43 // pred_fallthru
          _
      $region44: #{tpu_custom_call.1} parent=5 // pred_fallthru
        _
      %p553 = scmp.le.s32.totalorder 2, %s22
      // Predicated region
      $region65: #{tpu_custom_call.1} parent=5 // pred_check
        %p554 = pneg %p553
      $region66: #{tpu_custom_call.1} parent=5 // pred_check_branch
        %556 = sbr.rel (%p554) target = $region68
      $region67: #{tpu_custom_call.1} parent=5 // pred_region
        %s557 = ssub.s32 %s22, 2
        // Predicated region
        $region69: #{tpu_custom_call.1} parent=67 // pred_check
          %p558 = pneg %p187
        $region70: #{tpu_custom_call.1} parent=67 // pred_check_branch
          %560 = sbr.rel (%p558) target = $region72
        $region71: #{tpu_custom_call.1} parent=67 // pred_region
          %s561 = sand.u32 %s172, 1
          %s562 = scalar_lea.sflag [#allocation4], %s561
          %s563 = sand.u32 %s172, 1
          %s564 = smul.addr %s563, 8
          %s565 = scalar_lea.vmem [#allocation10], %s564
          %566 = dma.done %s562, 128
        $region72: #{tpu_custom_call.1} parent=67 // pred_fallthru
          _
      $region68: #{tpu_custom_call.1} parent=5 // pred_fallthru
        _
    $region6: #{tpu_custom_call.1} parent=1 // loop_footer
      %s26 = sadd.s32 1, %s22
    $region7: #{tpu_custom_call.1} parent=1 // loop_footer_branch
      %21 = sbr.rel target = $region3
    $region8: #{tpu_custom_call.1} parent=1 // loop_exit
      _
    %567 = vsyncpa [#allocation3], 1
    %s568 = scalar_lea.sflag [#allocation3], 1
    %569 = vsyncpa %s568, 1
    %570 = vsyncpa [#allocation6], 1
    %s571 = scalar_lea.sflag [#allocation6], 1
    %572 = vsyncpa %s571, 1
    %573 = vsyncpa [#allocation9], 1
    %574 = vsyncpa [#allocation4], 1
    %s575 = scalar_lea.sflag [#allocation4], 1
    %576 = vsyncpa %s575, 1

</llo_original>
